<compile_context>
chip_gen: v7x
topology: tpu7x:2x2x1
jax: 0.10.0
libtpu: 0.0.40
codegen_flags: <defaults>
</compile_context>

<pallas_src>
import functools

import jax
import jax.numpy as jnp
from jax.experimental import pallas as pl
from jax.experimental.pallas import tpu as pltpu

INPUT_SIZE = 1
HIDDEN_SIZE = 4
NUM_HIDDEN_LAYERS = 10            # module default
OUTPUT_SIZE = 1
N_MID = NUM_HIDDEN_LAYERS - 1     # number of hidden->hidden layers (9)

CHUNK_ROWS = 8                    # vreg-resident sub-tile height (one sublane group)

# The lane-dense "batch as a 2-D tile" trick relies on scalar in / scalar out.
assert INPUT_SIZE == 1 and OUTPUT_SIZE == 1

# ---- flat parameter layout (row-major, matches pack_params below) ----------
OFF_W0 = 0                                            # w0[0, j]      -> OFF_W0 + j
OFF_B0 = OFF_W0 + INPUT_SIZE * HIDDEN_SIZE            # b0[j]         -> OFF_B0 + j
OFF_WH = OFF_B0 + HIDDEN_SIZE                         # wh[l, k, j]   -> OFF_WH + l*H*H + k*H + j
OFF_BH = OFF_WH + N_MID * HIDDEN_SIZE * HIDDEN_SIZE   # bh[l, j]      -> OFF_BH + l*H + j
OFF_WO = OFF_BH + N_MID * HIDDEN_SIZE                 # wo[k, 0]      -> OFF_WO + k
OFF_BO = OFF_WO + HIDDEN_SIZE * OUTPUT_SIZE           # bo[0]         -> OFF_BO
N_PARAMS = OFF_BO + OUTPUT_SIZE                       # 193 floats


def mlp_kernel(x_ref, p_ref, out_ref):
    """Whole forward pass on one [block_rows, C] batch tile.

    x_ref/out_ref: [block_rows, C] f32 in VMEM -- each element is one sample.
    p_ref:         [N_PARAMS] f32 in SMEM -- all weights/biases, read as scalars.
    The tile is processed in vreg-resident [CHUNK_ROWS, C] sub-chunks; all math
    is scalar-broadcast FMA chains on the VPU (no MXU, no XLU).
    """
    H = HIDDEN_SIZE

    # ---- hoist all 193 scalar parameter reads once per grid step -----------
    w0 = [p_ref[OFF_W0 + j] for j in range(H)]
    b0 = [p_ref[OFF_B0 + j] for j in range(H)]
    wh = [[[p_ref[OFF_WH + l * H * H + k * H + j] for j in range(H)]
           for k in range(H)] for l in range(N_MID)]
    bh = [[p_ref[OFF_BH + l * H + j] for j in range(H)] for l in range(N_MID)]
    wo = [p_ref[OFF_WO + k] for k in range(H)]
    bo = p_ref[OFF_BO]

    n_chunks = x_ref.shape[0] // CHUNK_ROWS  # static Python int

    @pl.loop(0, n_chunks)
    def _(i):
        r = pl.multiple_of(i * CHUNK_ROWS, CHUNK_ROWS)
        x = x_ref[pl.ds(r, CHUNK_ROWS), :]                    # [8, C] = 4 vregs

        # Input layer: h_j = ReLU(w0[0, j] * x + b0[j])
        h = [jnp.maximum(w0[j] * x + b0[j], 0.0) for j in range(H)]

        # Hidden layers: h'_j = ReLU(sum_k wh[l, k, j] * h_k + bh[l, j])
        for l in range(N_MID):
            new_h = []
            for j in range(H):
                acc = wh[l][0][j] * h[0]
                for k in range(1, H):
                    acc = acc + wh[l][k][j] * h[k]
                new_h.append(jnp.maximum(acc + bh[l][j], 0.0))
            h = new_h

        # Output layer: y = sum_k wo[k, 0] * h_k + bo[0]   (no activation)
        y = wo[0] * h[0]
        for k in range(1, H):
            y = y + wo[k] * h[k]
        y = y + bo

        out_ref[pl.ds(r, CHUNK_ROWS), :] = y.astype(out_ref.dtype)


@functools.partial(jax.jit, static_argnames=("block_rows", "block_cols"))
def relu_fnn_forward(x, params_flat, *, block_rows=256, block_cols=512):
    """x: [B, 1] f32 (PyTorch nn.Linear convention). Returns [B, 1] f32."""
    B = x.shape[0]

    # Rows of width block_cols needed to hold the batch.
    rows = -(-B // block_cols)

    # Pick the per-step block height:
    #   * as large as requested (amortize per-step pipeline overhead),
    #   * but clamped so the grid keeps >= 2 steps when there is more than one
    #     chunk of work, so v7x's two TensorCores both get a share,
    #   * always a multiple of CHUNK_ROWS for the inner vreg-resident loop.
    br = block_rows
    if rows > CHUNK_ROWS:
        half = -(-rows // 2)
        half = -(-half // CHUNK_ROWS) * CHUNK_ROWS
        br = min(br, half)
    br = max(br, CHUNK_ROWS)
    assert br % CHUNK_ROWS == 0

    n_blocks = -(-rows // br)
    rows_p = n_blocks * br
    Bp = rows_p * block_cols

    # Pure layout plumbing: flatten, pad to a whole number of (br, C) tiles,
    # view as [rows_p, C] so every block is lane- and sublane-dense.
    xf = jnp.reshape(x, (B,))
    xf = jnp.pad(xf, (0, Bp - B))
    x2 = jnp.reshape(xf, (rows_p, block_cols))

    out2 = pl.pallas_call(
        mlp_kernel,
        out_shape=jax.ShapeDtypeStruct((rows_p, block_cols), x.dtype),
        grid=(n_blocks,),
        in_specs=[
            # batch tile, software-pipelined (default double-buffering)
            pl.BlockSpec((br, block_cols), lambda i: (i, 0)),
            # single flat parameter blob, resident in SMEM for the whole call
            pl.BlockSpec(memory_space=pltpu.MemorySpace.SMEM),
        ],
        out_specs=pl.BlockSpec((br, block_cols), lambda i: (i, 0)),
        compiler_params=pltpu.CompilerParams(
            dimension_semantics=("parallel",)),   # batch axis split across TCs on v7x
    )(x2, params_flat)

    return jnp.reshape(out2, (Bp,))[:B].reshape(B, OUTPUT_SIZE)


# --------------------------- parameters / reference --------------------------

def init_params(key):
    """Deterministic init mimicking PyTorch Linear default (U[-1/sqrt(fan_in), +])."""
    keys = jax.random.split(key, 2 * (NUM_HIDDEN_LAYERS + 1))

    def linear(kw, kb, fan_in, fan_out):
        bound = 1.0 / (fan_in ** 0.5)
        # stored as (in, out) == torch W.T
        w = jax.random.uniform(kw, (fan_in, fan_out), jnp.float32, -bound, bound)
        b = jax.random.uniform(kb, (fan_out,), jnp.float32, -bound, bound)
        return w, b

    w0, b0 = linear(keys[0], keys[1], INPUT_SIZE, HIDDEN_SIZE)

    whs, bhs = [], []
    for i in range(N_MID):
        w, b = linear(keys[2 + 2 * i], keys[3 + 2 * i], HIDDEN_SIZE, HIDDEN_SIZE)
        whs.append(w)
        bhs.append(b)
    wh = jnp.stack(whs, axis=0)                      # (9, 4, 4)
    bh = jnp.stack(bhs, axis=0)                      # (9, 4)

    wo, bo = linear(keys[-2], keys[-1], HIDDEN_SIZE, OUTPUT_SIZE)
    return w0, b0, wh, bh, wo, bo


def pack_params(w0, b0, wh, bh, wo, bo):
    """Pack all weights/biases into one flat f32 vector matching OFF_* layout."""
    flat = jnp.concatenate([
        w0.reshape(-1), b0.reshape(-1),
        wh.reshape(-1), bh.reshape(-1),
        wo.reshape(-1), bo.reshape(-1),
    ]).astype(jnp.float32)
    assert flat.shape[0] == N_PARAMS
    return flat


def reference_forward(x, w0, b0, wh, bh, wo, bo):
    """Pure-JAX reference matching the PyTorch module semantics."""
    h = jnp.maximum(x @ w0 + b0, 0.0)
    for l in range(N_MID):
        h = jnp.maximum(h @ wh[l] + bh[l], 0.0)
    return h @ wo + bo


if __name__ == "__main__":
    key = jax.random.PRNGKey(0)
    k_params, k_x = jax.random.split(key)

    params = init_params(k_params)
    params_flat = pack_params(*params)

    # Two small batches:
    #   * 5000  -> exercises padding + a 2-step grid with a single inner chunk,
    #   * 70000 -> exercises the multi-chunk inner loop (9 chunks/step) and the
    #              n_blocks >= 2 clamp, still only ~280 KB of input.
    for B in (5000, 70000):
        kx = jax.random.fold_in(k_x, B)
        x = jax.random.normal(kx, (B, INPUT_SIZE), jnp.float32)

        out = jax.block_until_ready(relu_fnn_forward(x, params_flat))
        ref = reference_forward(x, *params)

        assert out.shape == (B, OUTPUT_SIZE)
        assert jnp.allclose(out, ref, atol=1e-5, rtol=1e-5)

    print("KERNEL_OK")
</pallas_src>

<mosaic_0001>
module attributes {stable_mosaic.version = 11 : i64} {
  func.func @mlp_kernel(%arg0: i32, %arg1: memref<8x512xf32, #tpu.memory_space<vmem>>, %arg2: memref<193xf32, #tpu.memory_space<smem>>, %arg3: memref<8x512xf32, #tpu.memory_space<vmem>>) attributes {dimension_semantics = [#tpu.dimension_semantics<parallel>], iteration_bounds = array<i64: 2>, scalar_prefetch = 0 : i64, scratch_operands = 0 : i64, tpu.core_type = #tpu.core_type<tc>, window_params = [{transform_indices = @transform_0, window_bounds = array<i64: 8, 512>}, {transform_indices = @transform_1, window_bounds = array<i64: 193>}, {transform_indices = @transform_2, window_bounds = array<i64: 8, 512>}]} {
    %c0 = arith.constant 0 : index
    %0 = memref.load %arg2[%c0] : memref<193xf32, #tpu.memory_space<smem>>
    %c1 = arith.constant 1 : index
    %1 = memref.load %arg2[%c1] : memref<193xf32, #tpu.memory_space<smem>>
    %c2 = arith.constant 2 : index
    %2 = memref.load %arg2[%c2] : memref<193xf32, #tpu.memory_space<smem>>
    %c3 = arith.constant 3 : index
    %3 = memref.load %arg2[%c3] : memref<193xf32, #tpu.memory_space<smem>>
    %c4 = arith.constant 4 : index
    %4 = memref.load %arg2[%c4] : memref<193xf32, #tpu.memory_space<smem>>
    %c5 = arith.constant 5 : index
    %5 = memref.load %arg2[%c5] : memref<193xf32, #tpu.memory_space<smem>>
    %c6 = arith.constant 6 : index
    %6 = memref.load %arg2[%c6] : memref<193xf32, #tpu.memory_space<smem>>
    %c7 = arith.constant 7 : index
    %7 = memref.load %arg2[%c7] : memref<193xf32, #tpu.memory_space<smem>>
    %c8 = arith.constant 8 : index
    %8 = memref.load %arg2[%c8] : memref<193xf32, #tpu.memory_space<smem>>
    %c9 = arith.constant 9 : index
    %9 = memref.load %arg2[%c9] : memref<193xf32, #tpu.memory_space<smem>>
    %c10 = arith.constant 10 : index
    %10 = memref.load %arg2[%c10] : memref<193xf32, #tpu.memory_space<smem>>
    %c11 = arith.constant 11 : index
    %11 = memref.load %arg2[%c11] : memref<193xf32, #tpu.memory_space<smem>>
    %c12 = arith.constant 12 : index
    %12 = memref.load %arg2[%c12] : memref<193xf32, #tpu.memory_space<smem>>
    %c13 = arith.constant 13 : index
    %13 = memref.load %arg2[%c13] : memref<193xf32, #tpu.memory_space<smem>>
    %c14 = arith.constant 14 : index
    %14 = memref.load %arg2[%c14] : memref<193xf32, #tpu.memory_space<smem>>
    %c15 = arith.constant 15 : index
    %15 = memref.load %arg2[%c15] : memref<193xf32, #tpu.memory_space<smem>>
    %c16 = arith.constant 16 : index
    %16 = memref.load %arg2[%c16] : memref<193xf32, #tpu.memory_space<smem>>
    %c17 = arith.constant 17 : index
    %17 = memref.load %arg2[%c17] : memref<193xf32, #tpu.memory_space<smem>>
    %c18 = arith.constant 18 : index
    %18 = memref.load %arg2[%c18] : memref<193xf32, #tpu.memory_space<smem>>
    %c19 = arith.constant 19 : index
    %19 = memref.load %arg2[%c19] : memref<193xf32, #tpu.memory_space<smem>>
    %c20 = arith.constant 20 : index
    %20 = memref.load %arg2[%c20] : memref<193xf32, #tpu.memory_space<smem>>
    %c21 = arith.constant 21 : index
    %21 = memref.load %arg2[%c21] : memref<193xf32, #tpu.memory_space<smem>>
    %c22 = arith.constant 22 : index
    %22 = memref.load %arg2[%c22] : memref<193xf32, #tpu.memory_space<smem>>
    %c23 = arith.constant 23 : index
    %23 = memref.load %arg2[%c23] : memref<193xf32, #tpu.memory_space<smem>>
    %c24 = arith.constant 24 : index
    %24 = memref.load %arg2[%c24] : memref<193xf32, #tpu.memory_space<smem>>
    %c25 = arith.constant 25 : index
    %25 = memref.load %arg2[%c25] : memref<193xf32, #tpu.memory_space<smem>>
    %c26 = arith.constant 26 : index
    %26 = memref.load %arg2[%c26] : memref<193xf32, #tpu.memory_space<smem>>
    %c27 = arith.constant 27 : index
    %27 = memref.load %arg2[%c27] : memref<193xf32, #tpu.memory_space<smem>>
    %c28 = arith.constant 28 : index
    %28 = memref.load %arg2[%c28] : memref<193xf32, #tpu.memory_space<smem>>
    %c29 = arith.constant 29 : index
    %29 = memref.load %arg2[%c29] : memref<193xf32, #tpu.memory_space<smem>>
    %c30 = arith.constant 30 : index
    %30 = memref.load %arg2[%c30] : memref<193xf32, #tpu.memory_space<smem>>
    %c31 = arith.constant 31 : index
    %31 = memref.load %arg2[%c31] : memref<193xf32, #tpu.memory_space<smem>>
    %c32 = arith.constant 32 : index
    %32 = memref.load %arg2[%c32] : memref<193xf32, #tpu.memory_space<smem>>
    %c33 = arith.constant 33 : index
    %33 = memref.load %arg2[%c33] : memref<193xf32, #tpu.memory_space<smem>>
    %c34 = arith.constant 34 : index
    %34 = memref.load %arg2[%c34] : memref<193xf32, #tpu.memory_space<smem>>
    %c35 = arith.constant 35 : index
    %35 = memref.load %arg2[%c35] : memref<193xf32, #tpu.memory_space<smem>>
    %c36 = arith.constant 36 : index
    %36 = memref.load %arg2[%c36] : memref<193xf32, #tpu.memory_space<smem>>
    %c37 = arith.constant 37 : index
    %37 = memref.load %arg2[%c37] : memref<193xf32, #tpu.memory_space<smem>>
    %c38 = arith.constant 38 : index
    %38 = memref.load %arg2[%c38] : memref<193xf32, #tpu.memory_space<smem>>
    %c39 = arith.constant 39 : index
    %39 = memref.load %arg2[%c39] : memref<193xf32, #tpu.memory_space<smem>>
    %c40 = arith.constant 40 : index
    %40 = memref.load %arg2[%c40] : memref<193xf32, #tpu.memory_space<smem>>
    %c41 = arith.constant 41 : index
    %41 = memref.load %arg2[%c41] : memref<193xf32, #tpu.memory_space<smem>>
    %c42 = arith.constant 42 : index
    %42 = memref.load %arg2[%c42] : memref<193xf32, #tpu.memory_space<smem>>
    %c43 = arith.constant 43 : index
    %43 = memref.load %arg2[%c43] : memref<193xf32, #tpu.memory_space<smem>>
    %c44 = arith.constant 44 : index
    %44 = memref.load %arg2[%c44] : memref<193xf32, #tpu.memory_space<smem>>
    %c45 = arith.constant 45 : index
    %45 = memref.load %arg2[%c45] : memref<193xf32, #tpu.memory_space<smem>>
    %c46 = arith.constant 46 : index
    %46 = memref.load %arg2[%c46] : memref<193xf32, #tpu.memory_space<smem>>
    %c47 = arith.constant 47 : index
    %47 = memref.load %arg2[%c47] : memref<193xf32, #tpu.memory_space<smem>>
    %c48 = arith.constant 48 : index
    %48 = memref.load %arg2[%c48] : memref<193xf32, #tpu.memory_space<smem>>
    %c49 = arith.constant 49 : index
    %49 = memref.load %arg2[%c49] : memref<193xf32, #tpu.memory_space<smem>>
    %c50 = arith.constant 50 : index
    %50 = memref.load %arg2[%c50] : memref<193xf32, #tpu.memory_space<smem>>
    %c51 = arith.constant 51 : index
    %51 = memref.load %arg2[%c51] : memref<193xf32, #tpu.memory_space<smem>>
    %c52 = arith.constant 52 : index
    %52 = memref.load %arg2[%c52] : memref<193xf32, #tpu.memory_space<smem>>
    %c53 = arith.constant 53 : index
    %53 = memref.load %arg2[%c53] : memref<193xf32, #tpu.memory_space<smem>>
    %c54 = arith.constant 54 : index
    %54 = memref.load %arg2[%c54] : memref<193xf32, #tpu.memory_space<smem>>
    %c55 = arith.constant 55 : index
    %55 = memref.load %arg2[%c55] : memref<193xf32, #tpu.memory_space<smem>>
    %c56 = arith.constant 56 : index
    %56 = memref.load %arg2[%c56] : memref<193xf32, #tpu.memory_space<smem>>
    %c57 = arith.constant 57 : index
    %57 = memref.load %arg2[%c57] : memref<193xf32, #tpu.memory_space<smem>>
    %c58 = arith.constant 58 : index
    %58 = memref.load %arg2[%c58] : memref<193xf32, #tpu.memory_space<smem>>
    %c59 = arith.constant 59 : index
    %59 = memref.load %arg2[%c59] : memref<193xf32, #tpu.memory_space<smem>>
    %c60 = arith.constant 60 : index
    %60 = memref.load %arg2[%c60] : memref<193xf32, #tpu.memory_space<smem>>
    %c61 = arith.constant 61 : index
    %61 = memref.load %arg2[%c61] : memref<193xf32, #tpu.memory_space<smem>>
    %c62 = arith.constant 62 : index
    %62 = memref.load %arg2[%c62] : memref<193xf32, #tpu.memory_space<smem>>
    %c63 = arith.constant 63 : index
    %63 = memref.load %arg2[%c63] : memref<193xf32, #tpu.memory_space<smem>>
    %c64 = arith.constant 64 : index
    %64 = memref.load %arg2[%c64] : memref<193xf32, #tpu.memory_space<smem>>
    %c65 = arith.constant 65 : index
    %65 = memref.load %arg2[%c65] : memref<193xf32, #tpu.memory_space<smem>>
    %c66 = arith.constant 66 : index
    %66 = memref.load %arg2[%c66] : memref<193xf32, #tpu.memory_space<smem>>
    %c67 = arith.constant 67 : index
    %67 = memref.load %arg2[%c67] : memref<193xf32, #tpu.memory_space<smem>>
    %c68 = arith.constant 68 : index
    %68 = memref.load %arg2[%c68] : memref<193xf32, #tpu.memory_space<smem>>
    %c69 = arith.constant 69 : index
    %69 = memref.load %arg2[%c69] : memref<193xf32, #tpu.memory_space<smem>>
    %c70 = arith.constant 70 : index
    %70 = memref.load %arg2[%c70] : memref<193xf32, #tpu.memory_space<smem>>
    %c71 = arith.constant 71 : index
    %71 = memref.load %arg2[%c71] : memref<193xf32, #tpu.memory_space<smem>>
    %c72 = arith.constant 72 : index
    %72 = memref.load %arg2[%c72] : memref<193xf32, #tpu.memory_space<smem>>
    %c73 = arith.constant 73 : index
    %73 = memref.load %arg2[%c73] : memref<193xf32, #tpu.memory_space<smem>>
    %c74 = arith.constant 74 : index
    %74 = memref.load %arg2[%c74] : memref<193xf32, #tpu.memory_space<smem>>
    %c75 = arith.constant 75 : index
    %75 = memref.load %arg2[%c75] : memref<193xf32, #tpu.memory_space<smem>>
    %c76 = arith.constant 76 : index
    %76 = memref.load %arg2[%c76] : memref<193xf32, #tpu.memory_space<smem>>
    %c77 = arith.constant 77 : index
    %77 = memref.load %arg2[%c77] : memref<193xf32, #tpu.memory_space<smem>>
    %c78 = arith.constant 78 : index
    %78 = memref.load %arg2[%c78] : memref<193xf32, #tpu.memory_space<smem>>
    %c79 = arith.constant 79 : index
    %79 = memref.load %arg2[%c79] : memref<193xf32, #tpu.memory_space<smem>>
    %c80 = arith.constant 80 : index
    %80 = memref.load %arg2[%c80] : memref<193xf32, #tpu.memory_space<smem>>
    %c81 = arith.constant 81 : index
    %81 = memref.load %arg2[%c81] : memref<193xf32, #tpu.memory_space<smem>>
    %c82 = arith.constant 82 : index
    %82 = memref.load %arg2[%c82] : memref<193xf32, #tpu.memory_space<smem>>
    %c83 = arith.constant 83 : index
    %83 = memref.load %arg2[%c83] : memref<193xf32, #tpu.memory_space<smem>>
    %c84 = arith.constant 84 : index
    %84 = memref.load %arg2[%c84] : memref<193xf32, #tpu.memory_space<smem>>
    %c85 = arith.constant 85 : index
    %85 = memref.load %arg2[%c85] : memref<193xf32, #tpu.memory_space<smem>>
    %c86 = arith.constant 86 : index
    %86 = memref.load %arg2[%c86] : memref<193xf32, #tpu.memory_space<smem>>
    %c87 = arith.constant 87 : index
    %87 = memref.load %arg2[%c87] : memref<193xf32, #tpu.memory_space<smem>>
    %c88 = arith.constant 88 : index
    %88 = memref.load %arg2[%c88] : memref<193xf32, #tpu.memory_space<smem>>
    %c89 = arith.constant 89 : index
    %89 = memref.load %arg2[%c89] : memref<193xf32, #tpu.memory_space<smem>>
    %c90 = arith.constant 90 : index
    %90 = memref.load %arg2[%c90] : memref<193xf32, #tpu.memory_space<smem>>
    %c91 = arith.constant 91 : index
    %91 = memref.load %arg2[%c91] : memref<193xf32, #tpu.memory_space<smem>>
    %c92 = arith.constant 92 : index
    %92 = memref.load %arg2[%c92] : memref<193xf32, #tpu.memory_space<smem>>
    %c93 = arith.constant 93 : index
    %93 = memref.load %arg2[%c93] : memref<193xf32, #tpu.memory_space<smem>>
    %c94 = arith.constant 94 : index
    %94 = memref.load %arg2[%c94] : memref<193xf32, #tpu.memory_space<smem>>
    %c95 = arith.constant 95 : index
    %95 = memref.load %arg2[%c95] : memref<193xf32, #tpu.memory_space<smem>>
    %c96 = arith.constant 96 : index
    %96 = memref.load %arg2[%c96] : memref<193xf32, #tpu.memory_space<smem>>
    %c97 = arith.constant 97 : index
    %97 = memref.load %arg2[%c97] : memref<193xf32, #tpu.memory_space<smem>>
    %c98 = arith.constant 98 : index
    %98 = memref.load %arg2[%c98] : memref<193xf32, #tpu.memory_space<smem>>
    %c99 = arith.constant 99 : index
    %99 = memref.load %arg2[%c99] : memref<193xf32, #tpu.memory_space<smem>>
    %c100 = arith.constant 100 : index
    %100 = memref.load %arg2[%c100] : memref<193xf32, #tpu.memory_space<smem>>
    %c101 = arith.constant 101 : index
    %101 = memref.load %arg2[%c101] : memref<193xf32, #tpu.memory_space<smem>>
    %c102 = arith.constant 102 : index
    %102 = memref.load %arg2[%c102] : memref<193xf32, #tpu.memory_space<smem>>
    %c103 = arith.constant 103 : index
    %103 = memref.load %arg2[%c103] : memref<193xf32, #tpu.memory_space<smem>>
    %c104 = arith.constant 104 : index
    %104 = memref.load %arg2[%c104] : memref<193xf32, #tpu.memory_space<smem>>
    %c105 = arith.constant 105 : index
    %105 = memref.load %arg2[%c105] : memref<193xf32, #tpu.memory_space<smem>>
    %c106 = arith.constant 106 : index
    %106 = memref.load %arg2[%c106] : memref<193xf32, #tpu.memory_space<smem>>
    %c107 = arith.constant 107 : index
    %107 = memref.load %arg2[%c107] : memref<193xf32, #tpu.memory_space<smem>>
    %c108 = arith.constant 108 : index
    %108 = memref.load %arg2[%c108] : memref<193xf32, #tpu.memory_space<smem>>
    %c109 = arith.constant 109 : index
    %109 = memref.load %arg2[%c109] : memref<193xf32, #tpu.memory_space<smem>>
    %c110 = arith.constant 110 : index
    %110 = memref.load %arg2[%c110] : memref<193xf32, #tpu.memory_space<smem>>
    %c111 = arith.constant 111 : index
    %111 = memref.load %arg2[%c111] : memref<193xf32, #tpu.memory_space<smem>>
    %c112 = arith.constant 112 : index
    %112 = memref.load %arg2[%c112] : memref<193xf32, #tpu.memory_space<smem>>
    %c113 = arith.constant 113 : index
    %113 = memref.load %arg2[%c113] : memref<193xf32, #tpu.memory_space<smem>>
    %c114 = arith.constant 114 : index
    %114 = memref.load %arg2[%c114] : memref<193xf32, #tpu.memory_space<smem>>
    %c115 = arith.constant 115 : index
    %115 = memref.load %arg2[%c115] : memref<193xf32, #tpu.memory_space<smem>>
    %c116 = arith.constant 116 : index
    %116 = memref.load %arg2[%c116] : memref<193xf32, #tpu.memory_space<smem>>
    %c117 = arith.constant 117 : index
    %117 = memref.load %arg2[%c117] : memref<193xf32, #tpu.memory_space<smem>>
    %c118 = arith.constant 118 : index
    %118 = memref.load %arg2[%c118] : memref<193xf32, #tpu.memory_space<smem>>
    %c119 = arith.constant 119 : index
    %119 = memref.load %arg2[%c119] : memref<193xf32, #tpu.memory_space<smem>>
    %c120 = arith.constant 120 : index
    %120 = memref.load %arg2[%c120] : memref<193xf32, #tpu.memory_space<smem>>
    %c121 = arith.constant 121 : index
    %121 = memref.load %arg2[%c121] : memref<193xf32, #tpu.memory_space<smem>>
    %c122 = arith.constant 122 : index
    %122 = memref.load %arg2[%c122] : memref<193xf32, #tpu.memory_space<smem>>
    %c123 = arith.constant 123 : index
    %123 = memref.load %arg2[%c123] : memref<193xf32, #tpu.memory_space<smem>>
    %c124 = arith.constant 124 : index
    %124 = memref.load %arg2[%c124] : memref<193xf32, #tpu.memory_space<smem>>
    %c125 = arith.constant 125 : index
    %125 = memref.load %arg2[%c125] : memref<193xf32, #tpu.memory_space<smem>>
    %c126 = arith.constant 126 : index
    %126 = memref.load %arg2[%c126] : memref<193xf32, #tpu.memory_space<smem>>
    %c127 = arith.constant 127 : index
    %127 = memref.load %arg2[%c127] : memref<193xf32, #tpu.memory_space<smem>>
    %c128 = arith.constant 128 : index
    %128 = memref.load %arg2[%c128] : memref<193xf32, #tpu.memory_space<smem>>
    %c129 = arith.constant 129 : index
    %129 = memref.load %arg2[%c129] : memref<193xf32, #tpu.memory_space<smem>>
    %c130 = arith.constant 130 : index
    %130 = memref.load %arg2[%c130] : memref<193xf32, #tpu.memory_space<smem>>
    %c131 = arith.constant 131 : index
    %131 = memref.load %arg2[%c131] : memref<193xf32, #tpu.memory_space<smem>>
    %c132 = arith.constant 132 : index
    %132 = memref.load %arg2[%c132] : memref<193xf32, #tpu.memory_space<smem>>
    %c133 = arith.constant 133 : index
    %133 = memref.load %arg2[%c133] : memref<193xf32, #tpu.memory_space<smem>>
    %c134 = arith.constant 134 : index
    %134 = memref.load %arg2[%c134] : memref<193xf32, #tpu.memory_space<smem>>
    %c135 = arith.constant 135 : index
    %135 = memref.load %arg2[%c135] : memref<193xf32, #tpu.memory_space<smem>>
    %c136 = arith.constant 136 : index
    %136 = memref.load %arg2[%c136] : memref<193xf32, #tpu.memory_space<smem>>
    %c137 = arith.constant 137 : index
    %137 = memref.load %arg2[%c137] : memref<193xf32, #tpu.memory_space<smem>>
    %c138 = arith.constant 138 : index
    %138 = memref.load %arg2[%c138] : memref<193xf32, #tpu.memory_space<smem>>
    %c139 = arith.constant 139 : index
    %139 = memref.load %arg2[%c139] : memref<193xf32, #tpu.memory_space<smem>>
    %c140 = arith.constant 140 : index
    %140 = memref.load %arg2[%c140] : memref<193xf32, #tpu.memory_space<smem>>
    %c141 = arith.constant 141 : index
    %141 = memref.load %arg2[%c141] : memref<193xf32, #tpu.memory_space<smem>>
    %c142 = arith.constant 142 : index
    %142 = memref.load %arg2[%c142] : memref<193xf32, #tpu.memory_space<smem>>
    %c143 = arith.constant 143 : index
    %143 = memref.load %arg2[%c143] : memref<193xf32, #tpu.memory_space<smem>>
    %c144 = arith.constant 144 : index
    %144 = memref.load %arg2[%c144] : memref<193xf32, #tpu.memory_space<smem>>
    %c145 = arith.constant 145 : index
    %145 = memref.load %arg2[%c145] : memref<193xf32, #tpu.memory_space<smem>>
    %c146 = arith.constant 146 : index
    %146 = memref.load %arg2[%c146] : memref<193xf32, #tpu.memory_space<smem>>
    %c147 = arith.constant 147 : index
    %147 = memref.load %arg2[%c147] : memref<193xf32, #tpu.memory_space<smem>>
    %c148 = arith.constant 148 : index
    %148 = memref.load %arg2[%c148] : memref<193xf32, #tpu.memory_space<smem>>
    %c149 = arith.constant 149 : index
    %149 = memref.load %arg2[%c149] : memref<193xf32, #tpu.memory_space<smem>>
    %c150 = arith.constant 150 : index
    %150 = memref.load %arg2[%c150] : memref<193xf32, #tpu.memory_space<smem>>
    %c151 = arith.constant 151 : index
    %151 = memref.load %arg2[%c151] : memref<193xf32, #tpu.memory_space<smem>>
    %c152 = arith.constant 152 : index
    %152 = memref.load %arg2[%c152] : memref<193xf32, #tpu.memory_space<smem>>
    %c153 = arith.constant 153 : index
    %153 = memref.load %arg2[%c153] : memref<193xf32, #tpu.memory_space<smem>>
    %c154 = arith.constant 154 : index
    %154 = memref.load %arg2[%c154] : memref<193xf32, #tpu.memory_space<smem>>
    %c155 = arith.constant 155 : index
    %155 = memref.load %arg2[%c155] : memref<193xf32, #tpu.memory_space<smem>>
    %c156 = arith.constant 156 : index
    %156 = memref.load %arg2[%c156] : memref<193xf32, #tpu.memory_space<smem>>
    %c157 = arith.constant 157 : index
    %157 = memref.load %arg2[%c157] : memref<193xf32, #tpu.memory_space<smem>>
    %c158 = arith.constant 158 : index
    %158 = memref.load %arg2[%c158] : memref<193xf32, #tpu.memory_space<smem>>
    %c159 = arith.constant 159 : index
    %159 = memref.load %arg2[%c159] : memref<193xf32, #tpu.memory_space<smem>>
    %c160 = arith.constant 160 : index
    %160 = memref.load %arg2[%c160] : memref<193xf32, #tpu.memory_space<smem>>
    %c161 = arith.constant 161 : index
    %161 = memref.load %arg2[%c161] : memref<193xf32, #tpu.memory_space<smem>>
    %c162 = arith.constant 162 : index
    %162 = memref.load %arg2[%c162] : memref<193xf32, #tpu.memory_space<smem>>
    %c163 = arith.constant 163 : index
    %163 = memref.load %arg2[%c163] : memref<193xf32, #tpu.memory_space<smem>>
    %c164 = arith.constant 164 : index
    %164 = memref.load %arg2[%c164] : memref<193xf32, #tpu.memory_space<smem>>
    %c165 = arith.constant 165 : index
    %165 = memref.load %arg2[%c165] : memref<193xf32, #tpu.memory_space<smem>>
    %c166 = arith.constant 166 : index
    %166 = memref.load %arg2[%c166] : memref<193xf32, #tpu.memory_space<smem>>
    %c167 = arith.constant 167 : index
    %167 = memref.load %arg2[%c167] : memref<193xf32, #tpu.memory_space<smem>>
    %c168 = arith.constant 168 : index
    %168 = memref.load %arg2[%c168] : memref<193xf32, #tpu.memory_space<smem>>
    %c169 = arith.constant 169 : index
    %169 = memref.load %arg2[%c169] : memref<193xf32, #tpu.memory_space<smem>>
    %c170 = arith.constant 170 : index
    %170 = memref.load %arg2[%c170] : memref<193xf32, #tpu.memory_space<smem>>
    %c171 = arith.constant 171 : index
    %171 = memref.load %arg2[%c171] : memref<193xf32, #tpu.memory_space<smem>>
    %c172 = arith.constant 172 : index
    %172 = memref.load %arg2[%c172] : memref<193xf32, #tpu.memory_space<smem>>
    %c173 = arith.constant 173 : index
    %173 = memref.load %arg2[%c173] : memref<193xf32, #tpu.memory_space<smem>>
    %c174 = arith.constant 174 : index
    %174 = memref.load %arg2[%c174] : memref<193xf32, #tpu.memory_space<smem>>
    %c175 = arith.constant 175 : index
    %175 = memref.load %arg2[%c175] : memref<193xf32, #tpu.memory_space<smem>>
    %c176 = arith.constant 176 : index
    %176 = memref.load %arg2[%c176] : memref<193xf32, #tpu.memory_space<smem>>
    %c177 = arith.constant 177 : index
    %177 = memref.load %arg2[%c177] : memref<193xf32, #tpu.memory_space<smem>>
    %c178 = arith.constant 178 : index
    %178 = memref.load %arg2[%c178] : memref<193xf32, #tpu.memory_space<smem>>
    %c179 = arith.constant 179 : index
    %179 = memref.load %arg2[%c179] : memref<193xf32, #tpu.memory_space<smem>>
    %c180 = arith.constant 180 : index
    %180 = memref.load %arg2[%c180] : memref<193xf32, #tpu.memory_space<smem>>
    %c181 = arith.constant 181 : index
    %181 = memref.load %arg2[%c181] : memref<193xf32, #tpu.memory_space<smem>>
    %c182 = arith.constant 182 : index
    %182 = memref.load %arg2[%c182] : memref<193xf32, #tpu.memory_space<smem>>
    %c183 = arith.constant 183 : index
    %183 = memref.load %arg2[%c183] : memref<193xf32, #tpu.memory_space<smem>>
    %c184 = arith.constant 184 : index
    %184 = memref.load %arg2[%c184] : memref<193xf32, #tpu.memory_space<smem>>
    %c185 = arith.constant 185 : index
    %185 = memref.load %arg2[%c185] : memref<193xf32, #tpu.memory_space<smem>>
    %c186 = arith.constant 186 : index
    %186 = memref.load %arg2[%c186] : memref<193xf32, #tpu.memory_space<smem>>
    %c187 = arith.constant 187 : index
    %187 = memref.load %arg2[%c187] : memref<193xf32, #tpu.memory_space<smem>>
    %c188 = arith.constant 188 : index
    %188 = memref.load %arg2[%c188] : memref<193xf32, #tpu.memory_space<smem>>
    %c189 = arith.constant 189 : index
    %189 = memref.load %arg2[%c189] : memref<193xf32, #tpu.memory_space<smem>>
    %c190 = arith.constant 190 : index
    %190 = memref.load %arg2[%c190] : memref<193xf32, #tpu.memory_space<smem>>
    %c191 = arith.constant 191 : index
    %191 = memref.load %arg2[%c191] : memref<193xf32, #tpu.memory_space<smem>>
    %c192 = arith.constant 192 : index
    %192 = memref.load %arg2[%c192] : memref<193xf32, #tpu.memory_space<smem>>
    %c0_i32 = arith.constant 0 : i32
    %c1_i32 = arith.constant 1 : i32
    %193 = arith.muli %c0_i32, %c1_i32 : i32
    %c0_i32_0 = arith.constant 0 : i32
    %194 = arith.addi %c0_i32_0, %193 : i32
    %c8_i32 = arith.constant 8 : i32
    %195 = arith.muli %194, %c8_i32 : i32
    %196 = tpu.assume_multiple %195, 8 : i32
    %197 = arith.index_cast %196 : i32 to index
    %c0_1 = arith.constant 0 : index
    %198 = vector.load %arg1[%197, %c0_1] : memref<8x512xf32, #tpu.memory_space<vmem>>, vector<8x512xf32>
    %199 = vector.broadcast %0 : f32 to vector<8x512xf32>
    %200 = arith.mulf %199, %198 : vector<8x512xf32>
    %201 = vector.broadcast %4 : f32 to vector<8x512xf32>
    %202 = arith.addf %200, %201 : vector<8x512xf32>
    %cst = arith.constant 0.000000e+00 : f32
    %203 = vector.broadcast %cst : f32 to vector<8x512xf32>
    %204 = arith.maximumf %202, %203 : vector<8x512xf32>
    %205 = vector.broadcast %1 : f32 to vector<8x512xf32>
    %206 = arith.mulf %205, %198 : vector<8x512xf32>
    %207 = vector.broadcast %5 : f32 to vector<8x512xf32>
    %208 = arith.addf %206, %207 : vector<8x512xf32>
    %cst_2 = arith.constant 0.000000e+00 : f32
    %209 = vector.broadcast %cst_2 : f32 to vector<8x512xf32>
    %210 = arith.maximumf %208, %209 : vector<8x512xf32>
    %211 = vector.broadcast %2 : f32 to vector<8x512xf32>
    %212 = arith.mulf %211, %198 : vector<8x512xf32>
    %213 = vector.broadcast %6 : f32 to vector<8x512xf32>
    %214 = arith.addf %212, %213 : vector<8x512xf32>
    %cst_3 = arith.constant 0.000000e+00 : f32
    %215 = vector.broadcast %cst_3 : f32 to vector<8x512xf32>
    %216 = arith.maximumf %214, %215 : vector<8x512xf32>
    %217 = vector.broadcast %3 : f32 to vector<8x512xf32>
    %218 = arith.mulf %217, %198 : vector<8x512xf32>
    %219 = vector.broadcast %7 : f32 to vector<8x512xf32>
    %220 = arith.addf %218, %219 : vector<8x512xf32>
    %cst_4 = arith.constant 0.000000e+00 : f32
    %221 = vector.broadcast %cst_4 : f32 to vector<8x512xf32>
    %222 = arith.maximumf %220, %221 : vector<8x512xf32>
    %223 = vector.broadcast %8 : f32 to vector<8x512xf32>
    %224 = arith.mulf %223, %204 : vector<8x512xf32>
    %225 = vector.broadcast %12 : f32 to vector<8x512xf32>
    %226 = arith.mulf %225, %210 : vector<8x512xf32>
    %227 = arith.addf %224, %226 : vector<8x512xf32>
    %228 = vector.broadcast %16 : f32 to vector<8x512xf32>
    %229 = arith.mulf %228, %216 : vector<8x512xf32>
    %230 = arith.addf %227, %229 : vector<8x512xf32>
    %231 = vector.broadcast %20 : f32 to vector<8x512xf32>
    %232 = arith.mulf %231, %222 : vector<8x512xf32>
    %233 = arith.addf %230, %232 : vector<8x512xf32>
    %234 = vector.broadcast %152 : f32 to vector<8x512xf32>
    %235 = arith.addf %233, %234 : vector<8x512xf32>
    %cst_5 = arith.constant 0.000000e+00 : f32
    %236 = vector.broadcast %cst_5 : f32 to vector<8x512xf32>
    %237 = arith.maximumf %235, %236 : vector<8x512xf32>
    %238 = vector.broadcast %9 : f32 to vector<8x512xf32>
    %239 = arith.mulf %238, %204 : vector<8x512xf32>
    %240 = vector.broadcast %13 : f32 to vector<8x512xf32>
    %241 = arith.mulf %240, %210 : vector<8x512xf32>
    %242 = arith.addf %239, %241 : vector<8x512xf32>
    %243 = vector.broadcast %17 : f32 to vector<8x512xf32>
    %244 = arith.mulf %243, %216 : vector<8x512xf32>
    %245 = arith.addf %242, %244 : vector<8x512xf32>
    %246 = vector.broadcast %21 : f32 to vector<8x512xf32>
    %247 = arith.mulf %246, %222 : vector<8x512xf32>
    %248 = arith.addf %245, %247 : vector<8x512xf32>
    %249 = vector.broadcast %153 : f32 to vector<8x512xf32>
    %250 = arith.addf %248, %249 : vector<8x512xf32>
    %cst_6 = arith.constant 0.000000e+00 : f32
    %251 = vector.broadcast %cst_6 : f32 to vector<8x512xf32>
    %252 = arith.maximumf %250, %251 : vector<8x512xf32>
    %253 = vector.broadcast %10 : f32 to vector<8x512xf32>
    %254 = arith.mulf %253, %204 : vector<8x512xf32>
    %255 = vector.broadcast %14 : f32 to vector<8x512xf32>
    %256 = arith.mulf %255, %210 : vector<8x512xf32>
    %257 = arith.addf %254, %256 : vector<8x512xf32>
    %258 = vector.broadcast %18 : f32 to vector<8x512xf32>
    %259 = arith.mulf %258, %216 : vector<8x512xf32>
    %260 = arith.addf %257, %259 : vector<8x512xf32>
    %261 = vector.broadcast %22 : f32 to vector<8x512xf32>
    %262 = arith.mulf %261, %222 : vector<8x512xf32>
    %263 = arith.addf %260, %262 : vector<8x512xf32>
    %264 = vector.broadcast %154 : f32 to vector<8x512xf32>
    %265 = arith.addf %263, %264 : vector<8x512xf32>
    %cst_7 = arith.constant 0.000000e+00 : f32
    %266 = vector.broadcast %cst_7 : f32 to vector<8x512xf32>
    %267 = arith.maximumf %265, %266 : vector<8x512xf32>
    %268 = vector.broadcast %11 : f32 to vector<8x512xf32>
    %269 = arith.mulf %268, %204 : vector<8x512xf32>
    %270 = vector.broadcast %15 : f32 to vector<8x512xf32>
    %271 = arith.mulf %270, %210 : vector<8x512xf32>
    %272 = arith.addf %269, %271 : vector<8x512xf32>
    %273 = vector.broadcast %19 : f32 to vector<8x512xf32>
    %274 = arith.mulf %273, %216 : vector<8x512xf32>
    %275 = arith.addf %272, %274 : vector<8x512xf32>
    %276 = vector.broadcast %23 : f32 to vector<8x512xf32>
    %277 = arith.mulf %276, %222 : vector<8x512xf32>
    %278 = arith.addf %275, %277 : vector<8x512xf32>
    %279 = vector.broadcast %155 : f32 to vector<8x512xf32>
    %280 = arith.addf %278, %279 : vector<8x512xf32>
    %cst_8 = arith.constant 0.000000e+00 : f32
    %281 = vector.broadcast %cst_8 : f32 to vector<8x512xf32>
    %282 = arith.maximumf %280, %281 : vector<8x512xf32>
    %283 = vector.broadcast %24 : f32 to vector<8x512xf32>
    %284 = arith.mulf %283, %237 : vector<8x512xf32>
    %285 = vector.broadcast %28 : f32 to vector<8x512xf32>
    %286 = arith.mulf %285, %252 : vector<8x512xf32>
    %287 = arith.addf %284, %286 : vector<8x512xf32>
    %288 = vector.broadcast %32 : f32 to vector<8x512xf32>
    %289 = arith.mulf %288, %267 : vector<8x512xf32>
    %290 = arith.addf %287, %289 : vector<8x512xf32>
    %291 = vector.broadcast %36 : f32 to vector<8x512xf32>
    %292 = arith.mulf %291, %282 : vector<8x512xf32>
    %293 = arith.addf %290, %292 : vector<8x512xf32>
    %294 = vector.broadcast %156 : f32 to vector<8x512xf32>
    %295 = arith.addf %293, %294 : vector<8x512xf32>
    %cst_9 = arith.constant 0.000000e+00 : f32
    %296 = vector.broadcast %cst_9 : f32 to vector<8x512xf32>
    %297 = arith.maximumf %295, %296 : vector<8x512xf32>
    %298 = vector.broadcast %25 : f32 to vector<8x512xf32>
    %299 = arith.mulf %298, %237 : vector<8x512xf32>
    %300 = vector.broadcast %29 : f32 to vector<8x512xf32>
    %301 = arith.mulf %300, %252 : vector<8x512xf32>
    %302 = arith.addf %299, %301 : vector<8x512xf32>
    %303 = vector.broadcast %33 : f32 to vector<8x512xf32>
    %304 = arith.mulf %303, %267 : vector<8x512xf32>
    %305 = arith.addf %302, %304 : vector<8x512xf32>
    %306 = vector.broadcast %37 : f32 to vector<8x512xf32>
    %307 = arith.mulf %306, %282 : vector<8x512xf32>
    %308 = arith.addf %305, %307 : vector<8x512xf32>
    %309 = vector.broadcast %157 : f32 to vector<8x512xf32>
    %310 = arith.addf %308, %309 : vector<8x512xf32>
    %cst_10 = arith.constant 0.000000e+00 : f32
    %311 = vector.broadcast %cst_10 : f32 to vector<8x512xf32>
    %312 = arith.maximumf %310, %311 : vector<8x512xf32>
    %313 = vector.broadcast %26 : f32 to vector<8x512xf32>
    %314 = arith.mulf %313, %237 : vector<8x512xf32>
    %315 = vector.broadcast %30 : f32 to vector<8x512xf32>
    %316 = arith.mulf %315, %252 : vector<8x512xf32>
    %317 = arith.addf %314, %316 : vector<8x512xf32>
    %318 = vector.broadcast %34 : f32 to vector<8x512xf32>
    %319 = arith.mulf %318, %267 : vector<8x512xf32>
    %320 = arith.addf %317, %319 : vector<8x512xf32>
    %321 = vector.broadcast %38 : f32 to vector<8x512xf32>
    %322 = arith.mulf %321, %282 : vector<8x512xf32>
    %323 = arith.addf %320, %322 : vector<8x512xf32>
    %324 = vector.broadcast %158 : f32 to vector<8x512xf32>
    %325 = arith.addf %323, %324 : vector<8x512xf32>
    %cst_11 = arith.constant 0.000000e+00 : f32
    %326 = vector.broadcast %cst_11 : f32 to vector<8x512xf32>
    %327 = arith.maximumf %325, %326 : vector<8x512xf32>
    %328 = vector.broadcast %27 : f32 to vector<8x512xf32>
    %329 = arith.mulf %328, %237 : vector<8x512xf32>
    %330 = vector.broadcast %31 : f32 to vector<8x512xf32>
    %331 = arith.mulf %330, %252 : vector<8x512xf32>
    %332 = arith.addf %329, %331 : vector<8x512xf32>
    %333 = vector.broadcast %35 : f32 to vector<8x512xf32>
    %334 = arith.mulf %333, %267 : vector<8x512xf32>
    %335 = arith.addf %332, %334 : vector<8x512xf32>
    %336 = vector.broadcast %39 : f32 to vector<8x512xf32>
    %337 = arith.mulf %336, %282 : vector<8x512xf32>
    %338 = arith.addf %335, %337 : vector<8x512xf32>
    %339 = vector.broadcast %159 : f32 to vector<8x512xf32>
    %340 = arith.addf %338, %339 : vector<8x512xf32>
    %cst_12 = arith.constant 0.000000e+00 : f32
    %341 = vector.broadcast %cst_12 : f32 to vector<8x512xf32>
    %342 = arith.maximumf %340, %341 : vector<8x512xf32>
    %343 = vector.broadcast %40 : f32 to vector<8x512xf32>
    %344 = arith.mulf %343, %297 : vector<8x512xf32>
    %345 = vector.broadcast %44 : f32 to vector<8x512xf32>
    %346 = arith.mulf %345, %312 : vector<8x512xf32>
    %347 = arith.addf %344, %346 : vector<8x512xf32>
    %348 = vector.broadcast %48 : f32 to vector<8x512xf32>
    %349 = arith.mulf %348, %327 : vector<8x512xf32>
    %350 = arith.addf %347, %349 : vector<8x512xf32>
    %351 = vector.broadcast %52 : f32 to vector<8x512xf32>
    %352 = arith.mulf %351, %342 : vector<8x512xf32>
    %353 = arith.addf %350, %352 : vector<8x512xf32>
    %354 = vector.broadcast %160 : f32 to vector<8x512xf32>
    %355 = arith.addf %353, %354 : vector<8x512xf32>
    %cst_13 = arith.constant 0.000000e+00 : f32
    %356 = vector.broadcast %cst_13 : f32 to vector<8x512xf32>
    %357 = arith.maximumf %355, %356 : vector<8x512xf32>
    %358 = vector.broadcast %41 : f32 to vector<8x512xf32>
    %359 = arith.mulf %358, %297 : vector<8x512xf32>
    %360 = vector.broadcast %45 : f32 to vector<8x512xf32>
    %361 = arith.mulf %360, %312 : vector<8x512xf32>
    %362 = arith.addf %359, %361 : vector<8x512xf32>
    %363 = vector.broadcast %49 : f32 to vector<8x512xf32>
    %364 = arith.mulf %363, %327 : vector<8x512xf32>
    %365 = arith.addf %362, %364 : vector<8x512xf32>
    %366 = vector.broadcast %53 : f32 to vector<8x512xf32>
    %367 = arith.mulf %366, %342 : vector<8x512xf32>
    %368 = arith.addf %365, %367 : vector<8x512xf32>
    %369 = vector.broadcast %161 : f32 to vector<8x512xf32>
    %370 = arith.addf %368, %369 : vector<8x512xf32>
    %cst_14 = arith.constant 0.000000e+00 : f32
    %371 = vector.broadcast %cst_14 : f32 to vector<8x512xf32>
    %372 = arith.maximumf %370, %371 : vector<8x512xf32>
    %373 = vector.broadcast %42 : f32 to vector<8x512xf32>
    %374 = arith.mulf %373, %297 : vector<8x512xf32>
    %375 = vector.broadcast %46 : f32 to vector<8x512xf32>
    %376 = arith.mulf %375, %312 : vector<8x512xf32>
    %377 = arith.addf %374, %376 : vector<8x512xf32>
    %378 = vector.broadcast %50 : f32 to vector<8x512xf32>
    %379 = arith.mulf %378, %327 : vector<8x512xf32>
    %380 = arith.addf %377, %379 : vector<8x512xf32>
    %381 = vector.broadcast %54 : f32 to vector<8x512xf32>
    %382 = arith.mulf %381, %342 : vector<8x512xf32>
    %383 = arith.addf %380, %382 : vector<8x512xf32>
    %384 = vector.broadcast %162 : f32 to vector<8x512xf32>
    %385 = arith.addf %383, %384 : vector<8x512xf32>
    %cst_15 = arith.constant 0.000000e+00 : f32
    %386 = vector.broadcast %cst_15 : f32 to vector<8x512xf32>
    %387 = arith.maximumf %385, %386 : vector<8x512xf32>
    %388 = vector.broadcast %43 : f32 to vector<8x512xf32>
    %389 = arith.mulf %388, %297 : vector<8x512xf32>
    %390 = vector.broadcast %47 : f32 to vector<8x512xf32>
    %391 = arith.mulf %390, %312 : vector<8x512xf32>
    %392 = arith.addf %389, %391 : vector<8x512xf32>
    %393 = vector.broadcast %51 : f32 to vector<8x512xf32>
    %394 = arith.mulf %393, %327 : vector<8x512xf32>
    %395 = arith.addf %392, %394 : vector<8x512xf32>
    %396 = vector.broadcast %55 : f32 to vector<8x512xf32>
    %397 = arith.mulf %396, %342 : vector<8x512xf32>
    %398 = arith.addf %395, %397 : vector<8x512xf32>
    %399 = vector.broadcast %163 : f32 to vector<8x512xf32>
    %400 = arith.addf %398, %399 : vector<8x512xf32>
    %cst_16 = arith.constant 0.000000e+00 : f32
    %401 = vector.broadcast %cst_16 : f32 to vector<8x512xf32>
    %402 = arith.maximumf %400, %401 : vector<8x512xf32>
    %403 = vector.broadcast %56 : f32 to vector<8x512xf32>
    %404 = arith.mulf %403, %357 : vector<8x512xf32>
    %405 = vector.broadcast %60 : f32 to vector<8x512xf32>
    %406 = arith.mulf %405, %372 : vector<8x512xf32>
    %407 = arith.addf %404, %406 : vector<8x512xf32>
    %408 = vector.broadcast %64 : f32 to vector<8x512xf32>
    %409 = arith.mulf %408, %387 : vector<8x512xf32>
    %410 = arith.addf %407, %409 : vector<8x512xf32>
    %411 = vector.broadcast %68 : f32 to vector<8x512xf32>
    %412 = arith.mulf %411, %402 : vector<8x512xf32>
    %413 = arith.addf %410, %412 : vector<8x512xf32>
    %414 = vector.broadcast %164 : f32 to vector<8x512xf32>
    %415 = arith.addf %413, %414 : vector<8x512xf32>
    %cst_17 = arith.constant 0.000000e+00 : f32
    %416 = vector.broadcast %cst_17 : f32 to vector<8x512xf32>
    %417 = arith.maximumf %415, %416 : vector<8x512xf32>
    %418 = vector.broadcast %57 : f32 to vector<8x512xf32>
    %419 = arith.mulf %418, %357 : vector<8x512xf32>
    %420 = vector.broadcast %61 : f32 to vector<8x512xf32>
    %421 = arith.mulf %420, %372 : vector<8x512xf32>
    %422 = arith.addf %419, %421 : vector<8x512xf32>
    %423 = vector.broadcast %65 : f32 to vector<8x512xf32>
    %424 = arith.mulf %423, %387 : vector<8x512xf32>
    %425 = arith.addf %422, %424 : vector<8x512xf32>
    %426 = vector.broadcast %69 : f32 to vector<8x512xf32>
    %427 = arith.mulf %426, %402 : vector<8x512xf32>
    %428 = arith.addf %425, %427 : vector<8x512xf32>
    %429 = vector.broadcast %165 : f32 to vector<8x512xf32>
    %430 = arith.addf %428, %429 : vector<8x512xf32>
    %cst_18 = arith.constant 0.000000e+00 : f32
    %431 = vector.broadcast %cst_18 : f32 to vector<8x512xf32>
    %432 = arith.maximumf %430, %431 : vector<8x512xf32>
    %433 = vector.broadcast %58 : f32 to vector<8x512xf32>
    %434 = arith.mulf %433, %357 : vector<8x512xf32>
    %435 = vector.broadcast %62 : f32 to vector<8x512xf32>
    %436 = arith.mulf %435, %372 : vector<8x512xf32>
    %437 = arith.addf %434, %436 : vector<8x512xf32>
    %438 = vector.broadcast %66 : f32 to vector<8x512xf32>
    %439 = arith.mulf %438, %387 : vector<8x512xf32>
    %440 = arith.addf %437, %439 : vector<8x512xf32>
    %441 = vector.broadcast %70 : f32 to vector<8x512xf32>
    %442 = arith.mulf %441, %402 : vector<8x512xf32>
    %443 = arith.addf %440, %442 : vector<8x512xf32>
    %444 = vector.broadcast %166 : f32 to vector<8x512xf32>
    %445 = arith.addf %443, %444 : vector<8x512xf32>
    %cst_19 = arith.constant 0.000000e+00 : f32
    %446 = vector.broadcast %cst_19 : f32 to vector<8x512xf32>
    %447 = arith.maximumf %445, %446 : vector<8x512xf32>
    %448 = vector.broadcast %59 : f32 to vector<8x512xf32>
    %449 = arith.mulf %448, %357 : vector<8x512xf32>
    %450 = vector.broadcast %63 : f32 to vector<8x512xf32>
    %451 = arith.mulf %450, %372 : vector<8x512xf32>
    %452 = arith.addf %449, %451 : vector<8x512xf32>
    %453 = vector.broadcast %67 : f32 to vector<8x512xf32>
    %454 = arith.mulf %453, %387 : vector<8x512xf32>
    %455 = arith.addf %452, %454 : vector<8x512xf32>
    %456 = vector.broadcast %71 : f32 to vector<8x512xf32>
    %457 = arith.mulf %456, %402 : vector<8x512xf32>
    %458 = arith.addf %455, %457 : vector<8x512xf32>
    %459 = vector.broadcast %167 : f32 to vector<8x512xf32>
    %460 = arith.addf %458, %459 : vector<8x512xf32>
    %cst_20 = arith.constant 0.000000e+00 : f32
    %461 = vector.broadcast %cst_20 : f32 to vector<8x512xf32>
    %462 = arith.maximumf %460, %461 : vector<8x512xf32>
    %463 = vector.broadcast %72 : f32 to vector<8x512xf32>
    %464 = arith.mulf %463, %417 : vector<8x512xf32>
    %465 = vector.broadcast %76 : f32 to vector<8x512xf32>
    %466 = arith.mulf %465, %432 : vector<8x512xf32>
    %467 = arith.addf %464, %466 : vector<8x512xf32>
    %468 = vector.broadcast %80 : f32 to vector<8x512xf32>
    %469 = arith.mulf %468, %447 : vector<8x512xf32>
    %470 = arith.addf %467, %469 : vector<8x512xf32>
    %471 = vector.broadcast %84 : f32 to vector<8x512xf32>
    %472 = arith.mulf %471, %462 : vector<8x512xf32>
    %473 = arith.addf %470, %472 : vector<8x512xf32>
    %474 = vector.broadcast %168 : f32 to vector<8x512xf32>
    %475 = arith.addf %473, %474 : vector<8x512xf32>
    %cst_21 = arith.constant 0.000000e+00 : f32
    %476 = vector.broadcast %cst_21 : f32 to vector<8x512xf32>
    %477 = arith.maximumf %475, %476 : vector<8x512xf32>
    %478 = vector.broadcast %73 : f32 to vector<8x512xf32>
    %479 = arith.mulf %478, %417 : vector<8x512xf32>
    %480 = vector.broadcast %77 : f32 to vector<8x512xf32>
    %481 = arith.mulf %480, %432 : vector<8x512xf32>
    %482 = arith.addf %479, %481 : vector<8x512xf32>
    %483 = vector.broadcast %81 : f32 to vector<8x512xf32>
    %484 = arith.mulf %483, %447 : vector<8x512xf32>
    %485 = arith.addf %482, %484 : vector<8x512xf32>
    %486 = vector.broadcast %85 : f32 to vector<8x512xf32>
    %487 = arith.mulf %486, %462 : vector<8x512xf32>
    %488 = arith.addf %485, %487 : vector<8x512xf32>
    %489 = vector.broadcast %169 : f32 to vector<8x512xf32>
    %490 = arith.addf %488, %489 : vector<8x512xf32>
    %cst_22 = arith.constant 0.000000e+00 : f32
    %491 = vector.broadcast %cst_22 : f32 to vector<8x512xf32>
    %492 = arith.maximumf %490, %491 : vector<8x512xf32>
    %493 = vector.broadcast %74 : f32 to vector<8x512xf32>
    %494 = arith.mulf %493, %417 : vector<8x512xf32>
    %495 = vector.broadcast %78 : f32 to vector<8x512xf32>
    %496 = arith.mulf %495, %432 : vector<8x512xf32>
    %497 = arith.addf %494, %496 : vector<8x512xf32>
    %498 = vector.broadcast %82 : f32 to vector<8x512xf32>
    %499 = arith.mulf %498, %447 : vector<8x512xf32>
    %500 = arith.addf %497, %499 : vector<8x512xf32>
    %501 = vector.broadcast %86 : f32 to vector<8x512xf32>
    %502 = arith.mulf %501, %462 : vector<8x512xf32>
    %503 = arith.addf %500, %502 : vector<8x512xf32>
    %504 = vector.broadcast %170 : f32 to vector<8x512xf32>
    %505 = arith.addf %503, %504 : vector<8x512xf32>
    %cst_23 = arith.constant 0.000000e+00 : f32
    %506 = vector.broadcast %cst_23 : f32 to vector<8x512xf32>
    %507 = arith.maximumf %505, %506 : vector<8x512xf32>
    %508 = vector.broadcast %75 : f32 to vector<8x512xf32>
    %509 = arith.mulf %508, %417 : vector<8x512xf32>
    %510 = vector.broadcast %79 : f32 to vector<8x512xf32>
    %511 = arith.mulf %510, %432 : vector<8x512xf32>
    %512 = arith.addf %509, %511 : vector<8x512xf32>
    %513 = vector.broadcast %83 : f32 to vector<8x512xf32>
    %514 = arith.mulf %513, %447 : vector<8x512xf32>
    %515 = arith.addf %512, %514 : vector<8x512xf32>
    %516 = vector.broadcast %87 : f32 to vector<8x512xf32>
    %517 = arith.mulf %516, %462 : vector<8x512xf32>
    %518 = arith.addf %515, %517 : vector<8x512xf32>
    %519 = vector.broadcast %171 : f32 to vector<8x512xf32>
    %520 = arith.addf %518, %519 : vector<8x512xf32>
    %cst_24 = arith.constant 0.000000e+00 : f32
    %521 = vector.broadcast %cst_24 : f32 to vector<8x512xf32>
    %522 = arith.maximumf %520, %521 : vector<8x512xf32>
    %523 = vector.broadcast %88 : f32 to vector<8x512xf32>
    %524 = arith.mulf %523, %477 : vector<8x512xf32>
    %525 = vector.broadcast %92 : f32 to vector<8x512xf32>
    %526 = arith.mulf %525, %492 : vector<8x512xf32>
    %527 = arith.addf %524, %526 : vector<8x512xf32>
    %528 = vector.broadcast %96 : f32 to vector<8x512xf32>
    %529 = arith.mulf %528, %507 : vector<8x512xf32>
    %530 = arith.addf %527, %529 : vector<8x512xf32>
    %531 = vector.broadcast %100 : f32 to vector<8x512xf32>
    %532 = arith.mulf %531, %522 : vector<8x512xf32>
    %533 = arith.addf %530, %532 : vector<8x512xf32>
    %534 = vector.broadcast %172 : f32 to vector<8x512xf32>
    %535 = arith.addf %533, %534 : vector<8x512xf32>
    %cst_25 = arith.constant 0.000000e+00 : f32
    %536 = vector.broadcast %cst_25 : f32 to vector<8x512xf32>
    %537 = arith.maximumf %535, %536 : vector<8x512xf32>
    %538 = vector.broadcast %89 : f32 to vector<8x512xf32>
    %539 = arith.mulf %538, %477 : vector<8x512xf32>
    %540 = vector.broadcast %93 : f32 to vector<8x512xf32>
    %541 = arith.mulf %540, %492 : vector<8x512xf32>
    %542 = arith.addf %539, %541 : vector<8x512xf32>
    %543 = vector.broadcast %97 : f32 to vector<8x512xf32>
    %544 = arith.mulf %543, %507 : vector<8x512xf32>
    %545 = arith.addf %542, %544 : vector<8x512xf32>
    %546 = vector.broadcast %101 : f32 to vector<8x512xf32>
    %547 = arith.mulf %546, %522 : vector<8x512xf32>
    %548 = arith.addf %545, %547 : vector<8x512xf32>
    %549 = vector.broadcast %173 : f32 to vector<8x512xf32>
    %550 = arith.addf %548, %549 : vector<8x512xf32>
    %cst_26 = arith.constant 0.000000e+00 : f32
    %551 = vector.broadcast %cst_26 : f32 to vector<8x512xf32>
    %552 = arith.maximumf %550, %551 : vector<8x512xf32>
    %553 = vector.broadcast %90 : f32 to vector<8x512xf32>
    %554 = arith.mulf %553, %477 : vector<8x512xf32>
    %555 = vector.broadcast %94 : f32 to vector<8x512xf32>
    %556 = arith.mulf %555, %492 : vector<8x512xf32>
    %557 = arith.addf %554, %556 : vector<8x512xf32>
    %558 = vector.broadcast %98 : f32 to vector<8x512xf32>
    %559 = arith.mulf %558, %507 : vector<8x512xf32>
    %560 = arith.addf %557, %559 : vector<8x512xf32>
    %561 = vector.broadcast %102 : f32 to vector<8x512xf32>
    %562 = arith.mulf %561, %522 : vector<8x512xf32>
    %563 = arith.addf %560, %562 : vector<8x512xf32>
    %564 = vector.broadcast %174 : f32 to vector<8x512xf32>
    %565 = arith.addf %563, %564 : vector<8x512xf32>
    %cst_27 = arith.constant 0.000000e+00 : f32
    %566 = vector.broadcast %cst_27 : f32 to vector<8x512xf32>
    %567 = arith.maximumf %565, %566 : vector<8x512xf32>
    %568 = vector.broadcast %91 : f32 to vector<8x512xf32>
    %569 = arith.mulf %568, %477 : vector<8x512xf32>
    %570 = vector.broadcast %95 : f32 to vector<8x512xf32>
    %571 = arith.mulf %570, %492 : vector<8x512xf32>
    %572 = arith.addf %569, %571 : vector<8x512xf32>
    %573 = vector.broadcast %99 : f32 to vector<8x512xf32>
    %574 = arith.mulf %573, %507 : vector<8x512xf32>
    %575 = arith.addf %572, %574 : vector<8x512xf32>
    %576 = vector.broadcast %103 : f32 to vector<8x512xf32>
    %577 = arith.mulf %576, %522 : vector<8x512xf32>
    %578 = arith.addf %575, %577 : vector<8x512xf32>
    %579 = vector.broadcast %175 : f32 to vector<8x512xf32>
    %580 = arith.addf %578, %579 : vector<8x512xf32>
    %cst_28 = arith.constant 0.000000e+00 : f32
    %581 = vector.broadcast %cst_28 : f32 to vector<8x512xf32>
    %582 = arith.maximumf %580, %581 : vector<8x512xf32>
    %583 = vector.broadcast %104 : f32 to vector<8x512xf32>
    %584 = arith.mulf %583, %537 : vector<8x512xf32>
    %585 = vector.broadcast %108 : f32 to vector<8x512xf32>
    %586 = arith.mulf %585, %552 : vector<8x512xf32>
    %587 = arith.addf %584, %586 : vector<8x512xf32>
    %588 = vector.broadcast %112 : f32 to vector<8x512xf32>
    %589 = arith.mulf %588, %567 : vector<8x512xf32>
    %590 = arith.addf %587, %589 : vector<8x512xf32>
    %591 = vector.broadcast %116 : f32 to vector<8x512xf32>
    %592 = arith.mulf %591, %582 : vector<8x512xf32>
    %593 = arith.addf %590, %592 : vector<8x512xf32>
    %594 = vector.broadcast %176 : f32 to vector<8x512xf32>
    %595 = arith.addf %593, %594 : vector<8x512xf32>
    %cst_29 = arith.constant 0.000000e+00 : f32
    %596 = vector.broadcast %cst_29 : f32 to vector<8x512xf32>
    %597 = arith.maximumf %595, %596 : vector<8x512xf32>
    %598 = vector.broadcast %105 : f32 to vector<8x512xf32>
    %599 = arith.mulf %598, %537 : vector<8x512xf32>
    %600 = vector.broadcast %109 : f32 to vector<8x512xf32>
    %601 = arith.mulf %600, %552 : vector<8x512xf32>
    %602 = arith.addf %599, %601 : vector<8x512xf32>
    %603 = vector.broadcast %113 : f32 to vector<8x512xf32>
    %604 = arith.mulf %603, %567 : vector<8x512xf32>
    %605 = arith.addf %602, %604 : vector<8x512xf32>
    %606 = vector.broadcast %117 : f32 to vector<8x512xf32>
    %607 = arith.mulf %606, %582 : vector<8x512xf32>
    %608 = arith.addf %605, %607 : vector<8x512xf32>
    %609 = vector.broadcast %177 : f32 to vector<8x512xf32>
    %610 = arith.addf %608, %609 : vector<8x512xf32>
    %cst_30 = arith.constant 0.000000e+00 : f32
    %611 = vector.broadcast %cst_30 : f32 to vector<8x512xf32>
    %612 = arith.maximumf %610, %611 : vector<8x512xf32>
    %613 = vector.broadcast %106 : f32 to vector<8x512xf32>
    %614 = arith.mulf %613, %537 : vector<8x512xf32>
    %615 = vector.broadcast %110 : f32 to vector<8x512xf32>
    %616 = arith.mulf %615, %552 : vector<8x512xf32>
    %617 = arith.addf %614, %616 : vector<8x512xf32>
    %618 = vector.broadcast %114 : f32 to vector<8x512xf32>
    %619 = arith.mulf %618, %567 : vector<8x512xf32>
    %620 = arith.addf %617, %619 : vector<8x512xf32>
    %621 = vector.broadcast %118 : f32 to vector<8x512xf32>
    %622 = arith.mulf %621, %582 : vector<8x512xf32>
    %623 = arith.addf %620, %622 : vector<8x512xf32>
    %624 = vector.broadcast %178 : f32 to vector<8x512xf32>
    %625 = arith.addf %623, %624 : vector<8x512xf32>
    %cst_31 = arith.constant 0.000000e+00 : f32
    %626 = vector.broadcast %cst_31 : f32 to vector<8x512xf32>
    %627 = arith.maximumf %625, %626 : vector<8x512xf32>
    %628 = vector.broadcast %107 : f32 to vector<8x512xf32>
    %629 = arith.mulf %628, %537 : vector<8x512xf32>
    %630 = vector.broadcast %111 : f32 to vector<8x512xf32>
    %631 = arith.mulf %630, %552 : vector<8x512xf32>
    %632 = arith.addf %629, %631 : vector<8x512xf32>
    %633 = vector.broadcast %115 : f32 to vector<8x512xf32>
    %634 = arith.mulf %633, %567 : vector<8x512xf32>
    %635 = arith.addf %632, %634 : vector<8x512xf32>
    %636 = vector.broadcast %119 : f32 to vector<8x512xf32>
    %637 = arith.mulf %636, %582 : vector<8x512xf32>
    %638 = arith.addf %635, %637 : vector<8x512xf32>
    %639 = vector.broadcast %179 : f32 to vector<8x512xf32>
    %640 = arith.addf %638, %639 : vector<8x512xf32>
    %cst_32 = arith.constant 0.000000e+00 : f32
    %641 = vector.broadcast %cst_32 : f32 to vector<8x512xf32>
    %642 = arith.maximumf %640, %641 : vector<8x512xf32>
    %643 = vector.broadcast %120 : f32 to vector<8x512xf32>
    %644 = arith.mulf %643, %597 : vector<8x512xf32>
    %645 = vector.broadcast %124 : f32 to vector<8x512xf32>
    %646 = arith.mulf %645, %612 : vector<8x512xf32>
    %647 = arith.addf %644, %646 : vector<8x512xf32>
    %648 = vector.broadcast %128 : f32 to vector<8x512xf32>
    %649 = arith.mulf %648, %627 : vector<8x512xf32>
    %650 = arith.addf %647, %649 : vector<8x512xf32>
    %651 = vector.broadcast %132 : f32 to vector<8x512xf32>
    %652 = arith.mulf %651, %642 : vector<8x512xf32>
    %653 = arith.addf %650, %652 : vector<8x512xf32>
    %654 = vector.broadcast %180 : f32 to vector<8x512xf32>
    %655 = arith.addf %653, %654 : vector<8x512xf32>
    %cst_33 = arith.constant 0.000000e+00 : f32
    %656 = vector.broadcast %cst_33 : f32 to vector<8x512xf32>
    %657 = arith.maximumf %655, %656 : vector<8x512xf32>
    %658 = vector.broadcast %121 : f32 to vector<8x512xf32>
    %659 = arith.mulf %658, %597 : vector<8x512xf32>
    %660 = vector.broadcast %125 : f32 to vector<8x512xf32>
    %661 = arith.mulf %660, %612 : vector<8x512xf32>
    %662 = arith.addf %659, %661 : vector<8x512xf32>
    %663 = vector.broadcast %129 : f32 to vector<8x512xf32>
    %664 = arith.mulf %663, %627 : vector<8x512xf32>
    %665 = arith.addf %662, %664 : vector<8x512xf32>
    %666 = vector.broadcast %133 : f32 to vector<8x512xf32>
    %667 = arith.mulf %666, %642 : vector<8x512xf32>
    %668 = arith.addf %665, %667 : vector<8x512xf32>
    %669 = vector.broadcast %181 : f32 to vector<8x512xf32>
    %670 = arith.addf %668, %669 : vector<8x512xf32>
    %cst_34 = arith.constant 0.000000e+00 : f32
    %671 = vector.broadcast %cst_34 : f32 to vector<8x512xf32>
    %672 = arith.maximumf %670, %671 : vector<8x512xf32>
    %673 = vector.broadcast %122 : f32 to vector<8x512xf32>
    %674 = arith.mulf %673, %597 : vector<8x512xf32>
    %675 = vector.broadcast %126 : f32 to vector<8x512xf32>
    %676 = arith.mulf %675, %612 : vector<8x512xf32>
    %677 = arith.addf %674, %676 : vector<8x512xf32>
    %678 = vector.broadcast %130 : f32 to vector<8x512xf32>
    %679 = arith.mulf %678, %627 : vector<8x512xf32>
    %680 = arith.addf %677, %679 : vector<8x512xf32>
    %681 = vector.broadcast %134 : f32 to vector<8x512xf32>
    %682 = arith.mulf %681, %642 : vector<8x512xf32>
    %683 = arith.addf %680, %682 : vector<8x512xf32>
    %684 = vector.broadcast %182 : f32 to vector<8x512xf32>
    %685 = arith.addf %683, %684 : vector<8x512xf32>
    %cst_35 = arith.constant 0.000000e+00 : f32
    %686 = vector.broadcast %cst_35 : f32 to vector<8x512xf32>
    %687 = arith.maximumf %685, %686 : vector<8x512xf32>
    %688 = vector.broadcast %123 : f32 to vector<8x512xf32>
    %689 = arith.mulf %688, %597 : vector<8x512xf32>
    %690 = vector.broadcast %127 : f32 to vector<8x512xf32>
    %691 = arith.mulf %690, %612 : vector<8x512xf32>
    %692 = arith.addf %689, %691 : vector<8x512xf32>
    %693 = vector.broadcast %131 : f32 to vector<8x512xf32>
    %694 = arith.mulf %693, %627 : vector<8x512xf32>
    %695 = arith.addf %692, %694 : vector<8x512xf32>
    %696 = vector.broadcast %135 : f32 to vector<8x512xf32>
    %697 = arith.mulf %696, %642 : vector<8x512xf32>
    %698 = arith.addf %695, %697 : vector<8x512xf32>
    %699 = vector.broadcast %183 : f32 to vector<8x512xf32>
    %700 = arith.addf %698, %699 : vector<8x512xf32>
    %cst_36 = arith.constant 0.000000e+00 : f32
    %701 = vector.broadcast %cst_36 : f32 to vector<8x512xf32>
    %702 = arith.maximumf %700, %701 : vector<8x512xf32>
    %703 = vector.broadcast %136 : f32 to vector<8x512xf32>
    %704 = arith.mulf %703, %657 : vector<8x512xf32>
    %705 = vector.broadcast %140 : f32 to vector<8x512xf32>
    %706 = arith.mulf %705, %672 : vector<8x512xf32>
    %707 = arith.addf %704, %706 : vector<8x512xf32>
    %708 = vector.broadcast %144 : f32 to vector<8x512xf32>
    %709 = arith.mulf %708, %687 : vector<8x512xf32>
    %710 = arith.addf %707, %709 : vector<8x512xf32>
    %711 = vector.broadcast %148 : f32 to vector<8x512xf32>
    %712 = arith.mulf %711, %702 : vector<8x512xf32>
    %713 = arith.addf %710, %712 : vector<8x512xf32>
    %714 = vector.broadcast %184 : f32 to vector<8x512xf32>
    %715 = arith.addf %713, %714 : vector<8x512xf32>
    %cst_37 = arith.constant 0.000000e+00 : f32
    %716 = vector.broadcast %cst_37 : f32 to vector<8x512xf32>
    %717 = arith.maximumf %715, %716 : vector<8x512xf32>
    %718 = vector.broadcast %137 : f32 to vector<8x512xf32>
    %719 = arith.mulf %718, %657 : vector<8x512xf32>
    %720 = vector.broadcast %141 : f32 to vector<8x512xf32>
    %721 = arith.mulf %720, %672 : vector<8x512xf32>
    %722 = arith.addf %719, %721 : vector<8x512xf32>
    %723 = vector.broadcast %145 : f32 to vector<8x512xf32>
    %724 = arith.mulf %723, %687 : vector<8x512xf32>
    %725 = arith.addf %722, %724 : vector<8x512xf32>
    %726 = vector.broadcast %149 : f32 to vector<8x512xf32>
    %727 = arith.mulf %726, %702 : vector<8x512xf32>
    %728 = arith.addf %725, %727 : vector<8x512xf32>
    %729 = vector.broadcast %185 : f32 to vector<8x512xf32>
    %730 = arith.addf %728, %729 : vector<8x512xf32>
    %cst_38 = arith.constant 0.000000e+00 : f32
    %731 = vector.broadcast %cst_38 : f32 to vector<8x512xf32>
    %732 = arith.maximumf %730, %731 : vector<8x512xf32>
    %733 = vector.broadcast %138 : f32 to vector<8x512xf32>
    %734 = arith.mulf %733, %657 : vector<8x512xf32>
    %735 = vector.broadcast %142 : f32 to vector<8x512xf32>
    %736 = arith.mulf %735, %672 : vector<8x512xf32>
    %737 = arith.addf %734, %736 : vector<8x512xf32>
    %738 = vector.broadcast %146 : f32 to vector<8x512xf32>
    %739 = arith.mulf %738, %687 : vector<8x512xf32>
    %740 = arith.addf %737, %739 : vector<8x512xf32>
    %741 = vector.broadcast %150 : f32 to vector<8x512xf32>
    %742 = arith.mulf %741, %702 : vector<8x512xf32>
    %743 = arith.addf %740, %742 : vector<8x512xf32>
    %744 = vector.broadcast %186 : f32 to vector<8x512xf32>
    %745 = arith.addf %743, %744 : vector<8x512xf32>
    %cst_39 = arith.constant 0.000000e+00 : f32
    %746 = vector.broadcast %cst_39 : f32 to vector<8x512xf32>
    %747 = arith.maximumf %745, %746 : vector<8x512xf32>
    %748 = vector.broadcast %139 : f32 to vector<8x512xf32>
    %749 = arith.mulf %748, %657 : vector<8x512xf32>
    %750 = vector.broadcast %143 : f32 to vector<8x512xf32>
    %751 = arith.mulf %750, %672 : vector<8x512xf32>
    %752 = arith.addf %749, %751 : vector<8x512xf32>
    %753 = vector.broadcast %147 : f32 to vector<8x512xf32>
    %754 = arith.mulf %753, %687 : vector<8x512xf32>
    %755 = arith.addf %752, %754 : vector<8x512xf32>
    %756 = vector.broadcast %151 : f32 to vector<8x512xf32>
    %757 = arith.mulf %756, %702 : vector<8x512xf32>
    %758 = arith.addf %755, %757 : vector<8x512xf32>
    %759 = vector.broadcast %187 : f32 to vector<8x512xf32>
    %760 = arith.addf %758, %759 : vector<8x512xf32>
    %cst_40 = arith.constant 0.000000e+00 : f32
    %761 = vector.broadcast %cst_40 : f32 to vector<8x512xf32>
    %762 = arith.maximumf %760, %761 : vector<8x512xf32>
    %763 = vector.broadcast %188 : f32 to vector<8x512xf32>
    %764 = arith.mulf %763, %717 : vector<8x512xf32>
    %765 = vector.broadcast %189 : f32 to vector<8x512xf32>
    %766 = arith.mulf %765, %732 : vector<8x512xf32>
    %767 = arith.addf %764, %766 : vector<8x512xf32>
    %768 = vector.broadcast %190 : f32 to vector<8x512xf32>
    %769 = arith.mulf %768, %747 : vector<8x512xf32>
    %770 = arith.addf %767, %769 : vector<8x512xf32>
    %771 = vector.broadcast %191 : f32 to vector<8x512xf32>
    %772 = arith.mulf %771, %762 : vector<8x512xf32>
    %773 = arith.addf %770, %772 : vector<8x512xf32>
    %774 = vector.broadcast %192 : f32 to vector<8x512xf32>
    %775 = arith.addf %773, %774 : vector<8x512xf32>
    %776 = arith.index_cast %196 : i32 to index
    %c0_41 = arith.constant 0 : index
    %777 = vector.load %arg3[%776, %c0_41] : memref<8x512xf32, #tpu.memory_space<vmem>>, vector<8x512xf32>
    tpu.vector_store %arg3[%776, %c0_41], %775 {strides = array<i32>} : memref<8x512xf32, #tpu.memory_space<vmem>>, vector<8x512xf32>,
    %c1_i32_42 = arith.constant 1 : i32
    return
  }
  func.func @transform_0(%arg0: i32) -> (i32, i32) {
    %c0_i32 = arith.constant 0 : i32
    %c0_i32_0 = arith.constant 0 : i32
    return %arg0, %c0_i32 : i32, i32
  }
  func.func @transform_1(%arg0: i32) -> i32 {
    %c0_i32 = arith.constant 0 : i32
    %c0_i32_0 = arith.constant 0 : i32
    return %c0_i32 : i32
  }
  func.func @transform_2(%arg0: i32) -> (i32, i32) {
    %c0_i32 = arith.constant 0 : i32
    %c0_i32_0 = arith.constant 0 : i32
    return %arg0, %c0_i32 : i32, i32
  }
}

</mosaic_0001>

<llo_original>
// kernel: relu_fnn_forward.1
$region0: #{relu_fnn_forward.1}
  #allocation0 [shape = 'u32[]', space=smem, size = 0x4, offset = 0x4, fixed_abs, tag = 'smem constant byte address 0x4 - core index']
  #allocation1 [shape = 'u32[144,128]{1,0:T(1,128)}', space=vmem, size = 0x12000, scoped, tag = 'internal scratch']
  %s0 = inlined_call_operand.vmem [shape: f32[16,512], index: 0, kind: input, shape index: {}]
  %s1 = inlined_call_operand.vmem [shape: f32[193], index: 1, kind: input, shape index: {}]
  %s2 = inlined_call_operand.vmem [shape: f32[16,512], index: 2, kind: output, shape index: {}]
  %s3 = sld [smem:[#allocation0]]
  $region45: #{relu_fnn_forward.1} parent=0
    _
  %s5 = ssub.s32 1, %s3
  %s6 = scalar_select 0, %s5, %s3
  $region1: #{relu_fnn_forward.1} parent=0
    #allocation2 [shape = 'u8[1024]{0}', space=smem, size = 0x400, scoped, tag = 'input window, operand 1, single buffered']
    #allocation3 [shape = 's32[2]{0}', space=sflag, size = 0x8, scoped, tag = 'scoped memory for relu_fnn_forward.1']
    %7 = vsyncpa [#allocation3], 0
    loop: start=0, step=1, limit=4
    $region2: #{relu_fnn_forward.1} parent=1 // loop_pre_header
      _
    $region3: #{relu_fnn_forward.1} parent=1 // loop_header
      %s9 = sphi 0, %s13
      %p10 = scmp.ge.s32.totalorder %s9, 4
      %s19 = sphi 0, %s21
      %s22 = sphi 0, %s19
      %s23 = sphi 0, %s22
      %s39 = sphi 0, %s23
      %s43 = sphi 0, %s43
      %s45 = sphi 0, %s43
      %s46 = sphi 0, %s45
      %s60 = sphi 0, %s46
      %s66 = sphi 0, %s68
      %s69 = sphi 0, %s66
      %s70 = sphi 0, %s69
      %s86 = sphi 0, %s70
    $region4: #{relu_fnn_forward.1} parent=1 // loop_header_branch
      %12 = sbr.rel (%p10) target = $region8
    $region5: #{relu_fnn_forward.1} parent=1 // loop_body
      %s14 = ssub.s32 %s9, 1
      %s15 = ssub.s32 %s9, 2
      %s16 = sadd.s32 %s9, 1
      %s17 = ssub.s32 %s9, %s16
      %p18 = scmp.eq.s32.totalorder %s17, 0
      %s20 = sadd.s32 %s19, 1
      %s21 = scalar_select %p18, %s19, %s20
      %p24 = pneg %p18
      %p25 = scmp.eq.s32.totalorder %s9, 1
      %p26 = por %p24, %p25
      %p27 = scmp.ne.s32.totalorder %s19, %s22
      %p28 = scmp.eq.s32.totalorder %s9, 0
      %p29 = por %p27, %p28
      %p30 = scmp.ne.s32.totalorder %s19, %s22
      %p31 = scmp.eq.s32.totalorder %s14, 1
      %p32 = por %p30, %p31
      %p33 = scmp.ne.s32.totalorder %s22, %s23
      %p34 = scmp.eq.s32.totalorder %s14, 0
      %p35 = por %p33, %p34
      %p36 = scmp.ne.s32.totalorder %s22, %s23
      %p37 = scmp.eq.s32.totalorder %s15, 1
      %p38 = por %p36, %p37
      %p40 = scmp.ne.s32.totalorder %s23, %s39
      %p41 = scmp.eq.s32.totalorder %s15, 0
      %p42 = por %p40, %p41
      %s44 = sadd.s32 %s43, 1
      %p47 = scmp.eq.s32.totalorder %s9, 1
      %p48 = scmp.ne.s32.totalorder %s43, %s45
      %p49 = scmp.eq.s32.totalorder %s9, 0
      %p50 = por %p48, %p49
      %p51 = scmp.ne.s32.totalorder %s43, %s45
      %p52 = scmp.eq.s32.totalorder %s14, 1
      %p53 = por %p51, %p52
      %p54 = scmp.ne.s32.totalorder %s45, %s46
      %p55 = scmp.eq.s32.totalorder %s14, 0
      %p56 = por %p54, %p55
      %p57 = scmp.ne.s32.totalorder %s45, %s46
      %p58 = scmp.eq.s32.totalorder %s15, 1
      %p59 = por %p57, %p58
      %p61 = scmp.ne.s32.totalorder %s46, %s60
      %p62 = scmp.eq.s32.totalorder %s15, 0
      %p63 = por %p61, %p62
      %s64 = ssub.s32 %s9, %s16
      %p65 = scmp.eq.s32.totalorder %s64, 0
      %s67 = sadd.s32 %s66, 1
      %s68 = scalar_select %p65, %s66, %s67
      %p71 = pneg %p65
      %p72 = scmp.eq.s32.totalorder %s9, 1
      %p73 = por %p71, %p72
      %p74 = scmp.ne.s32.totalorder %s66, %s69
      %p75 = scmp.eq.s32.totalorder %s9, 0
      %p76 = por %p74, %p75
      %p77 = scmp.ne.s32.totalorder %s66, %s69
      %p78 = scmp.eq.s32.totalorder %s14, 1
      %p79 = por %p77, %p78
      %p80 = scmp.ne.s32.totalorder %s69, %s70
      %p81 = scmp.eq.s32.totalorder %s14, 0
      %p82 = por %p80, %p81
      %p83 = scmp.ne.s32.totalorder %s69, %s70
      %p84 = scmp.eq.s32.totalorder %s15, 1
      %p85 = por %p83, %p84
      %p87 = scmp.ne.s32.totalorder %s70, %s86
      %p88 = scmp.eq.s32.totalorder %s15, 0
      %p89 = por %p87, %p88
      %p90 = scmp.le.s32.totalorder 1, %s9
      %p91 = scmp.lt.s32.totalorder %s9, 3
      %p92 = pnand %p90, %p91
      %p93 = pneg %p92
      // Predicated region
      $region9: #{relu_fnn_forward.1} parent=5 // pred_check
        _
      $region10: #{relu_fnn_forward.1} parent=5 // pred_check_branch
        %95 = sbr.rel (%p92) target = $region12
      $region11: #{relu_fnn_forward.1} parent=5 // pred_region
        %s96 = ssub.s32 %s9, 1
        // Predicated region
        $region13: #{relu_fnn_forward.1} parent=11 // pred_check
          %p97 = pneg %p56
        $region14: #{relu_fnn_forward.1} parent=11 // pred_check_branch
          %99 = sbr.rel (%p97) target = $region16
        $region15: #{relu_fnn_forward.1} parent=11 // pred_region
          %s101 = ssub.s32 32, 32
          %102 = vsyncadd [#allocation3], %s101
          %s104 = sshll.u32 %s1, 4
          %s105 = int_to_ptr.vmem [resolvable:$true] %s104
          %107 = dma.vmem_to_smem %s105, 32, [#allocation2], [#allocation3]
        $region16: #{relu_fnn_forward.1} parent=11 // pred_fallthru
          _
      $region12: #{relu_fnn_forward.1} parent=5 // pred_fallthru
        _
      %p108 = scmp.lt.s32.totalorder %s9, 2
      // Predicated region
      $region17: #{relu_fnn_forward.1} parent=5 // pred_check
        %p109 = pneg %p108
      $region18: #{relu_fnn_forward.1} parent=5 // pred_check_branch
        %111 = sbr.rel (%p109) target = $region20
      $region19: #{relu_fnn_forward.1} parent=5 // pred_region
        // Predicated region
        $region21: #{relu_fnn_forward.1} parent=19 // pred_check
          %p112 = pneg %p29
        $region22: #{relu_fnn_forward.1} parent=19 // pred_check_branch
          %114 = sbr.rel (%p112) target = $region24
        $region23: #{relu_fnn_forward.1} parent=19 // pred_region
          %p115 = scmp.lt.s32.totalorder %s9, 1
          %s116 = scalar_select %p115, %s9, 1
          %s117 = smul.addr %s116, 4
          %s118 = smul.addr %s117, 8
          %s119 = scalar_lea.vmem %s0, %s118
        $region24: #{relu_fnn_forward.1} parent=19 // pred_fallthru
          _
      $region20: #{relu_fnn_forward.1} parent=5 // pred_fallthru
        _
      %p120 = scmp.le.s32.totalorder 1, %s9
      %p121 = scmp.lt.s32.totalorder %s9, 3
      %p122 = pnand %p120, %p121
      %p123 = pneg %p122
      // Predicated region
      $region25: #{relu_fnn_forward.1} parent=5 // pred_check
        _
      $region26: #{relu_fnn_forward.1} parent=5 // pred_check_branch
        %125 = sbr.rel (%p122) target = $region28
      $region27: #{relu_fnn_forward.1} parent=5 // pred_region
        %s126 = ssub.s32 %s9, 1
        // Predicated region
        $region29: #{relu_fnn_forward.1} parent=27 // pred_check
          %p127 = pneg %p56
        $region30: #{relu_fnn_forward.1} parent=27 // pred_check_branch
          %129 = sbr.rel (%p127) target = $region32
        $region31: #{relu_fnn_forward.1} parent=27 // pred_region
          %130 = dma.done [#allocation3], 32
        $region32: #{relu_fnn_forward.1} parent=27 // pred_fallthru
          _
        %131 = sfence
        %p132 = scmp.lt.s32.totalorder %s14, 1
        %s133 = scalar_select %p132, %s14, 1
        %s134 = smul.addr %s133, 4
        %s135 = smul.addr %s134, 8
        %s136 = scalar_lea.vmem %s0, %s135
        %p137 = pneg %p35
        %p138 = pneg %p32
        %p139 = pneg %p56
        %p140 = pneg %p53
        %p141 = pneg %p82
        %p142 = pneg %p79
        %p143 = scmp.lt.s32.totalorder %s14, 1
        %s144 = scalar_select %p143, %s14, 1
        %s145 = smul.addr %s144, 4
        %s146 = smul.addr %s145, 8
        %s147 = scalar_lea.vmem %s2, %s146
        %p148 = scmp.lt.s32.totalorder %s14, 1
        %s149 = scalar_select %p148, %s14, 1
        %s150 = smul.addr %s149, 4
        %s151 = smul.addr %s150, 8
        %s152 = scalar_lea.vmem %s0, %s151
        %p153 = scmp.lt.s32.totalorder %s14, 1
        %s154 = scalar_select %p153, %s14, 1
        %s155 = smul.addr %s154, 4
        %s156 = smul.addr %s155, 8
        %s157 = scalar_lea.vmem %s2, %s156
        %s158 = sld [smem:[#allocation2]]
        %s159 = sld [smem:[#allocation2 + $0x1]]
        %s160 = sld [smem:[#allocation2 + $0x2]]
        %s161 = sld [smem:[#allocation2 + $0x3]]
        %s162 = sld [smem:[#allocation2 + $0x4]]
        %s163 = sld [smem:[#allocation2 + $0x5]]
        %s164 = sld [smem:[#allocation2 + $0x6]]
        %s165 = sld [smem:[#allocation2 + $0x7]]
        %s166 = sld [smem:[#allocation2 + $0x8]]
        %s167 = sld [smem:[#allocation2 + $0x9]]
        %s168 = sld [smem:[#allocation2 + $0xa]]
        %s169 = sld [smem:[#allocation2 + $0xb]]
        %s170 = sld [smem:[#allocation2 + $0xc]]
        %s171 = sld [smem:[#allocation2 + $0xd]]
        %s172 = sld [smem:[#allocation2 + $0xe]]
        %s173 = sld [smem:[#allocation2 + $0xf]]
        %s174 = sld [smem:[#allocation2 + $0x10]]
        %s175 = sld [smem:[#allocation2 + $0x11]]
        %s176 = sld [smem:[#allocation2 + $0x12]]
        %s177 = sld [smem:[#allocation2 + $0x13]]
        %s178 = sld [smem:[#allocation2 + $0x14]]
        %s179 = sld [smem:[#allocation2 + $0x15]]
        %s180 = sld [smem:[#allocation2 + $0x16]]
        %s181 = sld [smem:[#allocation2 + $0x17]]
        %s182 = sld [smem:[#allocation2 + $0x18]]
        %s183 = sld [smem:[#allocation2 + $0x19]]
        %s184 = sld [smem:[#allocation2 + $0x1a]]
        %s185 = sld [smem:[#allocation2 + $0x1b]]
        %s186 = sld [smem:[#allocation2 + $0x1c]]
        %s187 = sld [smem:[#allocation2 + $0x1d]]
        %s188 = sld [smem:[#allocation2 + $0x1e]]
        %s189 = sld [smem:[#allocation2 + $0x1f]]
        %s190 = sld [smem:[#allocation2 + $0x20]]
        %s191 = sld [smem:[#allocation2 + $0x21]]
        %s192 = sld [smem:[#allocation2 + $0x22]]
        %s193 = sld [smem:[#allocation2 + $0x23]]
        %s194 = sld [smem:[#allocation2 + $0x24]]
        %s195 = sld [smem:[#allocation2 + $0x25]]
        %s196 = sld [smem:[#allocation2 + $0x26]]
        %s197 = sld [smem:[#allocation2 + $0x27]]
        %s198 = sld [smem:[#allocation2 + $0x28]]
        %s199 = sld [smem:[#allocation2 + $0x29]]
        %s200 = sld [smem:[#allocation2 + $0x2a]]
        %s201 = sld [smem:[#allocation2 + $0x2b]]
        %s202 = sld [smem:[#allocation2 + $0x2c]]
        %s203 = sld [smem:[#allocation2 + $0x2d]]
        %s204 = sld [smem:[#allocation2 + $0x2e]]
        %s205 = sld [smem:[#allocation2 + $0x2f]]
        %s206 = sld [smem:[#allocation2 + $0x30]]
        %s207 = sld [smem:[#allocation2 + $0x31]]
        %s208 = sld [smem:[#allocation2 + $0x32]]
        %s209 = sld [smem:[#allocation2 + $0x33]]
        %s210 = sld [smem:[#allocation2 + $0x34]]
        %s211 = sld [smem:[#allocation2 + $0x35]]
        %s212 = sld [smem:[#allocation2 + $0x36]]
        %s213 = sld [smem:[#allocation2 + $0x37]]
        %s214 = sld [smem:[#allocation2 + $0x38]]
        %s215 = sld [smem:[#allocation2 + $0x39]]
        %s216 = sld [smem:[#allocation2 + $0x3a]]
        %s217 = sld [smem:[#allocation2 + $0x3b]]
        %s218 = sld [smem:[#allocation2 + $0x3c]]
        %s219 = sld [smem:[#allocation2 + $0x3d]]
        %s220 = sld [smem:[#allocation2 + $0x3e]]
        %s221 = sld [smem:[#allocation2 + $0x3f]]
        %s222 = sld [smem:[#allocation2 + $0x40]]
        %s223 = sld [smem:[#allocation2 + $0x41]]
        %s224 = sld [smem:[#allocation2 + $0x42]]
        %s225 = sld [smem:[#allocation2 + $0x43]]
        %s226 = sld [smem:[#allocation2 + $0x44]]
        %s227 = sld [smem:[#allocation2 + $0x45]]
        %s228 = sld [smem:[#allocation2 + $0x46]]
        %s229 = sld [smem:[#allocation2 + $0x47]]
        %s230 = sld [smem:[#allocation2 + $0x48]]
        %s231 = sld [smem:[#allocation2 + $0x49]]
        %s232 = sld [smem:[#allocation2 + $0x4a]]
        %s233 = sld [smem:[#allocation2 + $0x4b]]
        %s234 = sld [smem:[#allocation2 + $0x4c]]
        %s235 = sld [smem:[#allocation2 + $0x4d]]
        %s236 = sld [smem:[#allocation2 + $0x4e]]
        %s237 = sld [smem:[#allocation2 + $0x4f]]
        %s238 = sld [smem:[#allocation2 + $0x50]]
        %s239 = sld [smem:[#allocation2 + $0x51]]
        %s240 = sld [smem:[#allocation2 + $0x52]]
        %s241 = sld [smem:[#allocation2 + $0x53]]
        %s242 = sld [smem:[#allocation2 + $0x54]]
        %s243 = sld [smem:[#allocation2 + $0x55]]
        %s244 = sld [smem:[#allocation2 + $0x56]]
        %s245 = sld [smem:[#allocation2 + $0x57]]
        %s246 = sld [smem:[#allocation2 + $0x58]]
        %s247 = sld [smem:[#allocation2 + $0x59]]
        %s248 = sld [smem:[#allocation2 + $0x5a]]
        %s249 = sld [smem:[#allocation2 + $0x5b]]
        %s250 = sld [smem:[#allocation2 + $0x5c]]
        %s251 = sld [smem:[#allocation2 + $0x5d]]
        %s252 = sld [smem:[#allocation2 + $0x5e]]
        %s253 = sld [smem:[#allocation2 + $0x5f]]
        %s254 = sld [smem:[#allocation2 + $0x60]]
        %s255 = sld [smem:[#allocation2 + $0x61]]
        %s256 = sld [smem:[#allocation2 + $0x62]]
        %s257 = sld [smem:[#allocation2 + $0x63]]
        %s258 = sld [smem:[#allocation2 + $0x64]]
        %s259 = sld [smem:[#allocation2 + $0x65]]
        %s260 = sld [smem:[#allocation2 + $0x66]]
        %s261 = sld [smem:[#allocation2 + $0x67]]
        %s262 = sld [smem:[#allocation2 + $0x68]]
        %s263 = sld [smem:[#allocation2 + $0x69]]
        %s264 = sld [smem:[#allocation2 + $0x6a]]
        %s265 = sld [smem:[#allocation2 + $0x6b]]
        %s266 = sld [smem:[#allocation2 + $0x6c]]
        %s267 = sld [smem:[#allocation2 + $0x6d]]
        %s268 = sld [smem:[#allocation2 + $0x6e]]
        %s269 = sld [smem:[#allocation2 + $0x6f]]
        %s270 = sld [smem:[#allocation2 + $0x70]]
        %s271 = sld [smem:[#allocation2 + $0x71]]
        %s272 = sld [smem:[#allocation2 + $0x72]]
        %s273 = sld [smem:[#allocation2 + $0x73]]
        %s274 = sld [smem:[#allocation2 + $0x74]]
        %s275 = sld [smem:[#allocation2 + $0x75]]
        %s276 = sld [smem:[#allocation2 + $0x76]]
        %s277 = sld [smem:[#allocation2 + $0x77]]
        %s278 = sld [smem:[#allocation2 + $0x78]]
        %s279 = sld [smem:[#allocation2 + $0x79]]
        %s280 = sld [smem:[#allocation2 + $0x7a]]
        %s281 = sld [smem:[#allocation2 + $0x7b]]
        %s282 = sld [smem:[#allocation2 + $0x7c]]
        %s283 = sld [smem:[#allocation2 + $0x7d]]
        %s284 = sld [smem:[#allocation2 + $0x7e]]
        %s285 = sld [smem:[#allocation2 + $0x7f]]
        %s286 = sld [smem:[#allocation2 + $0x80]]
        %s287 = sld [smem:[#allocation2 + $0x81]]
        %s288 = sld [smem:[#allocation2 + $0x82]]
        %s289 = sld [smem:[#allocation2 + $0x83]]
        %s290 = sld [smem:[#allocation2 + $0x84]]
        %s291 = sld [smem:[#allocation2 + $0x85]]
        %s292 = sld [smem:[#allocation2 + $0x86]]
        %s293 = sld [smem:[#allocation2 + $0x87]]
        %s294 = sld [smem:[#allocation2 + $0x88]]
        %s295 = sld [smem:[#allocation2 + $0x89]]
        %s296 = sld [smem:[#allocation2 + $0x8a]]
        %s297 = sld [smem:[#allocation2 + $0x8b]]
        %s298 = sld [smem:[#allocation2 + $0x8c]]
        %s299 = sld [smem:[#allocation2 + $0x8d]]
        %s300 = sld [smem:[#allocation2 + $0x8e]]
        %s301 = sld [smem:[#allocation2 + $0x8f]]
        %s302 = sld [smem:[#allocation2 + $0x90]]
        %s303 = sld [smem:[#allocation2 + $0x91]]
        %s304 = sld [smem:[#allocation2 + $0x92]]
        %s305 = sld [smem:[#allocation2 + $0x93]]
        %s306 = sld [smem:[#allocation2 + $0x94]]
        %s307 = sld [smem:[#allocation2 + $0x95]]
        %s308 = sld [smem:[#allocation2 + $0x96]]
        %s309 = sld [smem:[#allocation2 + $0x97]]
        %s310 = sld [smem:[#allocation2 + $0x98]]
        %s311 = sld [smem:[#allocation2 + $0x99]]
        %s312 = sld [smem:[#allocation2 + $0x9a]]
        %s313 = sld [smem:[#allocation2 + $0x9b]]
        %s314 = sld [smem:[#allocation2 + $0x9c]]
        %s315 = sld [smem:[#allocation2 + $0x9d]]
        %s316 = sld [smem:[#allocation2 + $0x9e]]
        %s317 = sld [smem:[#allocation2 + $0x9f]]
        %s318 = sld [smem:[#allocation2 + $0xa0]]
        %s319 = sld [smem:[#allocation2 + $0xa1]]
        %s320 = sld [smem:[#allocation2 + $0xa2]]
        %s321 = sld [smem:[#allocation2 + $0xa3]]
        %s322 = sld [smem:[#allocation2 + $0xa4]]
        %s323 = sld [smem:[#allocation2 + $0xa5]]
        %s324 = sld [smem:[#allocation2 + $0xa6]]
        %s325 = sld [smem:[#allocation2 + $0xa7]]
        %s326 = sld [smem:[#allocation2 + $0xa8]]
        %s327 = sld [smem:[#allocation2 + $0xa9]]
        %s328 = sld [smem:[#allocation2 + $0xaa]]
        %s329 = sld [smem:[#allocation2 + $0xab]]
        %s330 = sld [smem:[#allocation2 + $0xac]]
        %s331 = sld [smem:[#allocation2 + $0xad]]
        %s332 = sld [smem:[#allocation2 + $0xae]]
        %s333 = sld [smem:[#allocation2 + $0xaf]]
        %s334 = sld [smem:[#allocation2 + $0xb0]]
        %s335 = sld [smem:[#allocation2 + $0xb1]]
        %s336 = sld [smem:[#allocation2 + $0xb2]]
        %s337 = sld [smem:[#allocation2 + $0xb3]]
        %s338 = sld [smem:[#allocation2 + $0xb4]]
        %s339 = sld [smem:[#allocation2 + $0xb5]]
        %s340 = sld [smem:[#allocation2 + $0xb6]]
        %s341 = sld [smem:[#allocation2 + $0xb7]]
        %s342 = sld [smem:[#allocation2 + $0xb8]]
        %s343 = sld [smem:[#allocation2 + $0xb9]]
        %s344 = sld [smem:[#allocation2 + $0xba]]
        %s345 = sld [smem:[#allocation2 + $0xbb]]
        %s346 = sld [smem:[#allocation2 + $0xbc]]
        %s347 = sld [smem:[#allocation2 + $0xbd]]
        %s348 = sld [smem:[#allocation2 + $0xbe]]
        %s349 = sld [smem:[#allocation2 + $0xbf]]
        %s350 = sld [smem:[#allocation2 + $0xc0]]
        %s351 = smul.u32 0, 4
        %s352 = smul.addr %s351, 8
        %s353 = scalar_lea.vmem %s152, %s352
        %v354 = vld [vmem:[%s353] sm:$0xff]
        %v355 = vld [vmem:[%s353 + $0x8] sm:$0xff]
        %v356 = vld [vmem:[%s353 + $0x10] sm:$0xff]
        %v357 = vld [vmem:[%s353 + $0x18] sm:$0xff]
        %v358 = vstv %s158
        %v359 = vmul.f32 %v358, %v354
        %v360 = vmul.f32 %v358, %v355
        %v361 = vmul.f32 %v358, %v356
        %v362 = vmul.f32 %v358, %v357
        %v363 = vstv %s162
        %v364 = vadd.f32 %v359, %v363
        %v365 = vadd.f32 %v360, %v363
        %v366 = vadd.f32 %v361, %v363
        %v367 = vadd.f32 %v362, %v363
        %v368 = vmax.f32 %v364, 0.0
        %v369 = vmax.f32 %v365, 0.0
        %v370 = vmax.f32 %v366, 0.0
        %v371 = vmax.f32 %v367, 0.0
        %v372 = vstv %s159
        %v373 = vmul.f32 %v372, %v354
        %v374 = vmul.f32 %v372, %v355
        %v375 = vmul.f32 %v372, %v356
        %v376 = vmul.f32 %v372, %v357
        %v377 = vstv %s163
        %v378 = vadd.f32 %v373, %v377
        %v379 = vadd.f32 %v374, %v377
        %v380 = vadd.f32 %v375, %v377
        %v381 = vadd.f32 %v376, %v377
        %v382 = vmax.f32 %v378, 0.0
        %v383 = vmax.f32 %v379, 0.0
        %v384 = vmax.f32 %v380, 0.0
        %v385 = vmax.f32 %v381, 0.0
        %v386 = vstv %s160
        %v387 = vmul.f32 %v386, %v354
        %v388 = vmul.f32 %v386, %v355
        %v389 = vmul.f32 %v386, %v356
        %v390 = vmul.f32 %v386, %v357
        %v391 = vstv %s164
        %v392 = vadd.f32 %v387, %v391
        %v393 = vadd.f32 %v388, %v391
        %v394 = vadd.f32 %v389, %v391
        %v395 = vadd.f32 %v390, %v391
        %v396 = vmax.f32 %v392, 0.0
        %v397 = vmax.f32 %v393, 0.0
        %v398 = vmax.f32 %v394, 0.0
        %v399 = vmax.f32 %v395, 0.0
        %v400 = vstv %s161
        %v401 = vmul.f32 %v400, %v354
        %v402 = vmul.f32 %v400, %v355
        %v403 = vmul.f32 %v400, %v356
        %v404 = vmul.f32 %v400, %v357
        %v405 = vstv %s165
        %v406 = vadd.f32 %v401, %v405
        %v407 = vadd.f32 %v402, %v405
        %v408 = vadd.f32 %v403, %v405
        %v409 = vadd.f32 %v404, %v405
        %v410 = vmax.f32 %v406, 0.0
        %v411 = vmax.f32 %v407, 0.0
        %v412 = vmax.f32 %v408, 0.0
        %v413 = vmax.f32 %v409, 0.0
        %v414 = vstv %s166
        %v415 = vmul.f32 %v414, %v368
        %v416 = vmul.f32 %v414, %v369
        %v417 = vmul.f32 %v414, %v370
        %v418 = vmul.f32 %v414, %v371
        %v419 = vstv %s170
        %v420 = vmul.f32 %v419, %v382
        %v421 = vmul.f32 %v419, %v383
        %v422 = vmul.f32 %v419, %v384
        %v423 = vmul.f32 %v419, %v385
        %v424 = vadd.f32 %v415, %v420
        %v425 = vadd.f32 %v416, %v421
        %v426 = vadd.f32 %v417, %v422
        %v427 = vadd.f32 %v418, %v423
        %v428 = vstv %s174
        %v429 = vmul.f32 %v428, %v396
        %v430 = vmul.f32 %v428, %v397
        %v431 = vmul.f32 %v428, %v398
        %v432 = vmul.f32 %v428, %v399
        %v433 = vadd.f32 %v424, %v429
        %v434 = vadd.f32 %v425, %v430
        %v435 = vadd.f32 %v426, %v431
        %v436 = vadd.f32 %v427, %v432
        %v437 = vstv %s178
        %v438 = vmul.f32 %v437, %v410
        %v439 = vmul.f32 %v437, %v411
        %v440 = vmul.f32 %v437, %v412
        %v441 = vmul.f32 %v437, %v413
        %v442 = vadd.f32 %v433, %v438
        %v443 = vadd.f32 %v434, %v439
        %v444 = vadd.f32 %v435, %v440
        %v445 = vadd.f32 %v436, %v441
        %v446 = vstv %s310
        %v447 = vadd.f32 %v442, %v446
        %v448 = vadd.f32 %v443, %v446
        %v449 = vadd.f32 %v444, %v446
        %v450 = vadd.f32 %v445, %v446
        %v451 = vmax.f32 %v447, 0.0
        %v452 = vmax.f32 %v448, 0.0
        %v453 = vmax.f32 %v449, 0.0
        %v454 = vmax.f32 %v450, 0.0
        %v455 = vstv %s167
        %v456 = vmul.f32 %v455, %v368
        %v457 = vmul.f32 %v455, %v369
        %v458 = vmul.f32 %v455, %v370
        %v459 = vmul.f32 %v455, %v371
        %v460 = vstv %s171
        %v461 = vmul.f32 %v460, %v382
        %v462 = vmul.f32 %v460, %v383
        %v463 = vmul.f32 %v460, %v384
        %v464 = vmul.f32 %v460, %v385
        %v465 = vadd.f32 %v456, %v461
        %v466 = vadd.f32 %v457, %v462
        %v467 = vadd.f32 %v458, %v463
        %v468 = vadd.f32 %v459, %v464
        %v469 = vstv %s175
        %v470 = vmul.f32 %v469, %v396
        %v471 = vmul.f32 %v469, %v397
        %v472 = vmul.f32 %v469, %v398
        %v473 = vmul.f32 %v469, %v399
        %v474 = vadd.f32 %v465, %v470
        %v475 = vadd.f32 %v466, %v471
        %v476 = vadd.f32 %v467, %v472
        %v477 = vadd.f32 %v468, %v473
        %v478 = vstv %s179
        %v479 = vmul.f32 %v478, %v410
        %v480 = vmul.f32 %v478, %v411
        %v481 = vmul.f32 %v478, %v412
        %v482 = vmul.f32 %v478, %v413
        %v483 = vadd.f32 %v474, %v479
        %v484 = vadd.f32 %v475, %v480
        %v485 = vadd.f32 %v476, %v481
        %v486 = vadd.f32 %v477, %v482
        %v487 = vstv %s311
        %v488 = vadd.f32 %v483, %v487
        %v489 = vadd.f32 %v484, %v487
        %v490 = vadd.f32 %v485, %v487
        %v491 = vadd.f32 %v486, %v487
        %v492 = vmax.f32 %v488, 0.0
        %v493 = vmax.f32 %v489, 0.0
        %v494 = vmax.f32 %v490, 0.0
        %v495 = vmax.f32 %v491, 0.0
        %v496 = vstv %s168
        %v497 = vmul.f32 %v496, %v368
        %v498 = vmul.f32 %v496, %v369
        %v499 = vmul.f32 %v496, %v370
        %v500 = vmul.f32 %v496, %v371
        %v501 = vstv %s172
        %v502 = vmul.f32 %v501, %v382
        %v503 = vmul.f32 %v501, %v383
        %v504 = vmul.f32 %v501, %v384
        %v505 = vmul.f32 %v501, %v385
        %v506 = vadd.f32 %v497, %v502
        %v507 = vadd.f32 %v498, %v503
        %v508 = vadd.f32 %v499, %v504
        %v509 = vadd.f32 %v500, %v505
        %v510 = vstv %s176
        %v511 = vmul.f32 %v510, %v396
        %v512 = vmul.f32 %v510, %v397
        %v513 = vmul.f32 %v510, %v398
        %v514 = vmul.f32 %v510, %v399
        %v515 = vadd.f32 %v506, %v511
        %v516 = vadd.f32 %v507, %v512
        %v517 = vadd.f32 %v508, %v513
        %v518 = vadd.f32 %v509, %v514
        %v519 = vstv %s180
        %v520 = vmul.f32 %v519, %v410
        %v521 = vmul.f32 %v519, %v411
        %v522 = vmul.f32 %v519, %v412
        %v523 = vmul.f32 %v519, %v413
        %v524 = vadd.f32 %v515, %v520
        %v525 = vadd.f32 %v516, %v521
        %v526 = vadd.f32 %v517, %v522
        %v527 = vadd.f32 %v518, %v523
        %v528 = vstv %s312
        %v529 = vadd.f32 %v524, %v528
        %v530 = vadd.f32 %v525, %v528
        %v531 = vadd.f32 %v526, %v528
        %v532 = vadd.f32 %v527, %v528
        %v533 = vmax.f32 %v529, 0.0
        %v534 = vmax.f32 %v530, 0.0
        %v535 = vmax.f32 %v531, 0.0
        %v536 = vmax.f32 %v532, 0.0
        %v537 = vstv %s169
        %v538 = vmul.f32 %v537, %v368
        %v539 = vmul.f32 %v537, %v369
        %v540 = vmul.f32 %v537, %v370
        %v541 = vmul.f32 %v537, %v371
        %v542 = vstv %s173
        %v543 = vmul.f32 %v542, %v382
        %v544 = vmul.f32 %v542, %v383
        %v545 = vmul.f32 %v542, %v384
        %v546 = vmul.f32 %v542, %v385
        %v547 = vadd.f32 %v538, %v543
        %v548 = vadd.f32 %v539, %v544
        %v549 = vadd.f32 %v540, %v545
        %v550 = vadd.f32 %v541, %v546
        %v551 = vstv %s177
        %v552 = vmul.f32 %v551, %v396
        %v553 = vmul.f32 %v551, %v397
        %v554 = vmul.f32 %v551, %v398
        %v555 = vmul.f32 %v551, %v399
        %v556 = vadd.f32 %v547, %v552
        %v557 = vadd.f32 %v548, %v553
        %v558 = vadd.f32 %v549, %v554
        %v559 = vadd.f32 %v550, %v555
        %v560 = vstv %s181
        %v561 = vmul.f32 %v560, %v410
        %v562 = vmul.f32 %v560, %v411
        %v563 = vmul.f32 %v560, %v412
        %v564 = vmul.f32 %v560, %v413
        %v565 = vadd.f32 %v556, %v561
        %v566 = vadd.f32 %v557, %v562
        %v567 = vadd.f32 %v558, %v563
        %v568 = vadd.f32 %v559, %v564
        %v569 = vstv %s313
        %v570 = vadd.f32 %v565, %v569
        %v571 = vadd.f32 %v566, %v569
        %v572 = vadd.f32 %v567, %v569
        %v573 = vadd.f32 %v568, %v569
        %v574 = vmax.f32 %v570, 0.0
        %v575 = vmax.f32 %v571, 0.0
        %v576 = vmax.f32 %v572, 0.0
        %v577 = vmax.f32 %v573, 0.0
        %v578 = vstv %s182
        %v579 = vmul.f32 %v578, %v451
        %v580 = vmul.f32 %v578, %v452
        %v581 = vmul.f32 %v578, %v453
        %v582 = vmul.f32 %v578, %v454
        %v583 = vstv %s186
        %v584 = vmul.f32 %v583, %v492
        %v585 = vmul.f32 %v583, %v493
        %v586 = vmul.f32 %v583, %v494
        %v587 = vmul.f32 %v583, %v495
        %v588 = vadd.f32 %v579, %v584
        %v589 = vadd.f32 %v580, %v585
        %v590 = vadd.f32 %v581, %v586
        %v591 = vadd.f32 %v582, %v587
        %v592 = vstv %s190
        %v593 = vmul.f32 %v592, %v533
        %v594 = vmul.f32 %v592, %v534
        %v595 = vmul.f32 %v592, %v535
        %v596 = vmul.f32 %v592, %v536
        %v597 = vadd.f32 %v588, %v593
        %v598 = vadd.f32 %v589, %v594
        %v599 = vadd.f32 %v590, %v595
        %v600 = vadd.f32 %v591, %v596
        %v601 = vstv %s194
        %v602 = vmul.f32 %v601, %v574
        %v603 = vmul.f32 %v601, %v575
        %v604 = vmul.f32 %v601, %v576
        %v605 = vmul.f32 %v601, %v577
        %v606 = vadd.f32 %v597, %v602
        %v607 = vadd.f32 %v598, %v603
        %v608 = vadd.f32 %v599, %v604
        %v609 = vadd.f32 %v600, %v605
        %v610 = vstv %s314
        %v611 = vadd.f32 %v606, %v610
        %v612 = vadd.f32 %v607, %v610
        %v613 = vadd.f32 %v608, %v610
        %v614 = vadd.f32 %v609, %v610
        %v615 = vmax.f32 %v611, 0.0
        %v616 = vmax.f32 %v612, 0.0
        %v617 = vmax.f32 %v613, 0.0
        %v618 = vmax.f32 %v614, 0.0
        %v619 = vstv %s183
        %v620 = vmul.f32 %v619, %v451
        %v621 = vmul.f32 %v619, %v452
        %v622 = vmul.f32 %v619, %v453
        %v623 = vmul.f32 %v619, %v454
        %v624 = vstv %s187
        %v625 = vmul.f32 %v624, %v492
        %v626 = vmul.f32 %v624, %v493
        %v627 = vmul.f32 %v624, %v494
        %v628 = vmul.f32 %v624, %v495
        %v629 = vadd.f32 %v620, %v625
        %v630 = vadd.f32 %v621, %v626
        %v631 = vadd.f32 %v622, %v627
        %v632 = vadd.f32 %v623, %v628
        %v633 = vstv %s191
        %v634 = vmul.f32 %v633, %v533
        %v635 = vmul.f32 %v633, %v534
        %v636 = vmul.f32 %v633, %v535
        %v637 = vmul.f32 %v633, %v536
        %v638 = vadd.f32 %v629, %v634
        %v639 = vadd.f32 %v630, %v635
        %v640 = vadd.f32 %v631, %v636
        %v641 = vadd.f32 %v632, %v637
        %v642 = vstv %s195
        %v643 = vmul.f32 %v642, %v574
        %v644 = vmul.f32 %v642, %v575
        %v645 = vmul.f32 %v642, %v576
        %v646 = vmul.f32 %v642, %v577
        %v647 = vadd.f32 %v638, %v643
        %v648 = vadd.f32 %v639, %v644
        %v649 = vadd.f32 %v640, %v645
        %v650 = vadd.f32 %v641, %v646
        %v651 = vstv %s315
        %v652 = vadd.f32 %v647, %v651
        %v653 = vadd.f32 %v648, %v651
        %v654 = vadd.f32 %v649, %v651
        %v655 = vadd.f32 %v650, %v651
        %v656 = vmax.f32 %v652, 0.0
        %v657 = vmax.f32 %v653, 0.0
        %v658 = vmax.f32 %v654, 0.0
        %v659 = vmax.f32 %v655, 0.0
        %v660 = vstv %s184
        %v661 = vmul.f32 %v660, %v451
        %v662 = vmul.f32 %v660, %v452
        %v663 = vmul.f32 %v660, %v453
        %v664 = vmul.f32 %v660, %v454
        %v665 = vstv %s188
        %v666 = vmul.f32 %v665, %v492
        %v667 = vmul.f32 %v665, %v493
        %v668 = vmul.f32 %v665, %v494
        %v669 = vmul.f32 %v665, %v495
        %v670 = vadd.f32 %v661, %v666
        %v671 = vadd.f32 %v662, %v667
        %v672 = vadd.f32 %v663, %v668
        %v673 = vadd.f32 %v664, %v669
        %v674 = vstv %s192
        %v675 = vmul.f32 %v674, %v533
        %v676 = vmul.f32 %v674, %v534
        %v677 = vmul.f32 %v674, %v535
        %v678 = vmul.f32 %v674, %v536
        %v679 = vadd.f32 %v670, %v675
        %v680 = vadd.f32 %v671, %v676
        %v681 = vadd.f32 %v672, %v677
        %v682 = vadd.f32 %v673, %v678
        %v683 = vstv %s196
        %v684 = vmul.f32 %v683, %v574
        %v685 = vmul.f32 %v683, %v575
        %v686 = vmul.f32 %v683, %v576
        %v687 = vmul.f32 %v683, %v577
        %v688 = vadd.f32 %v679, %v684
        %v689 = vadd.f32 %v680, %v685
        %v690 = vadd.f32 %v681, %v686
        %v691 = vadd.f32 %v682, %v687
        %v692 = vstv %s316
        %v693 = vadd.f32 %v688, %v692
        %v694 = vadd.f32 %v689, %v692
        %v695 = vadd.f32 %v690, %v692
        %v696 = vadd.f32 %v691, %v692
        %v697 = vmax.f32 %v693, 0.0
        %v698 = vmax.f32 %v694, 0.0
        %v699 = vmax.f32 %v695, 0.0
        %v700 = vmax.f32 %v696, 0.0
        %v701 = vstv %s185
        %v702 = vmul.f32 %v701, %v451
        %v703 = vmul.f32 %v701, %v452
        %v704 = vmul.f32 %v701, %v453
        %v705 = vmul.f32 %v701, %v454
        %v706 = vstv %s189
        %v707 = vmul.f32 %v706, %v492
        %v708 = vmul.f32 %v706, %v493
        %v709 = vmul.f32 %v706, %v494
        %v710 = vmul.f32 %v706, %v495
        %v711 = vadd.f32 %v702, %v707
        %v712 = vadd.f32 %v703, %v708
        %v713 = vadd.f32 %v704, %v709
        %v714 = vadd.f32 %v705, %v710
        %v715 = vstv %s193
        %v716 = vmul.f32 %v715, %v533
        %v717 = vmul.f32 %v715, %v534
        %v718 = vmul.f32 %v715, %v535
        %v719 = vmul.f32 %v715, %v536
        %v720 = vadd.f32 %v711, %v716
        %v721 = vadd.f32 %v712, %v717
        %v722 = vadd.f32 %v713, %v718
        %v723 = vadd.f32 %v714, %v719
        %v724 = vstv %s197
        %v725 = vmul.f32 %v724, %v574
        %v726 = vmul.f32 %v724, %v575
        %v727 = vmul.f32 %v724, %v576
        %v728 = vmul.f32 %v724, %v577
        %v729 = vadd.f32 %v720, %v725
        %v730 = vadd.f32 %v721, %v726
        %v731 = vadd.f32 %v722, %v727
        %v732 = vadd.f32 %v723, %v728
        %v733 = vstv %s317
        %v734 = vadd.f32 %v729, %v733
        %v735 = vadd.f32 %v730, %v733
        %v736 = vadd.f32 %v731, %v733
        %v737 = vadd.f32 %v732, %v733
        %v738 = vmax.f32 %v734, 0.0
        %v739 = vmax.f32 %v735, 0.0
        %v740 = vmax.f32 %v736, 0.0
        %v741 = vmax.f32 %v737, 0.0
        %v742 = vstv %s198
        %v743 = vmul.f32 %v742, %v615
        %v744 = vmul.f32 %v742, %v616
        %v745 = vmul.f32 %v742, %v617
        %v746 = vmul.f32 %v742, %v618
        %v747 = vstv %s202
        %v748 = vmul.f32 %v747, %v656
        %v749 = vmul.f32 %v747, %v657
        %v750 = vmul.f32 %v747, %v658
        %v751 = vmul.f32 %v747, %v659
        %v752 = vadd.f32 %v743, %v748
        %v753 = vadd.f32 %v744, %v749
        %v754 = vadd.f32 %v745, %v750
        %v755 = vadd.f32 %v746, %v751
        %v756 = vstv %s206
        %v757 = vmul.f32 %v756, %v697
        %v758 = vmul.f32 %v756, %v698
        %v759 = vmul.f32 %v756, %v699
        %v760 = vmul.f32 %v756, %v700
        %v761 = vadd.f32 %v752, %v757
        %v762 = vadd.f32 %v753, %v758
        %v763 = vadd.f32 %v754, %v759
        %v764 = vadd.f32 %v755, %v760
        %v765 = vstv %s210
        %v766 = vmul.f32 %v765, %v738
        %v767 = vmul.f32 %v765, %v739
        %v768 = vmul.f32 %v765, %v740
        %v769 = vmul.f32 %v765, %v741
        %v770 = vadd.f32 %v761, %v766
        %v771 = vadd.f32 %v762, %v767
        %v772 = vadd.f32 %v763, %v768
        %v773 = vadd.f32 %v764, %v769
        %v774 = vstv %s318
        %v775 = vadd.f32 %v770, %v774
        %v776 = vadd.f32 %v771, %v774
        %v777 = vadd.f32 %v772, %v774
        %v778 = vadd.f32 %v773, %v774
        %v779 = vmax.f32 %v775, 0.0
        %v780 = vmax.f32 %v776, 0.0
        %v781 = vmax.f32 %v777, 0.0
        %v782 = vmax.f32 %v778, 0.0
        %v783 = vstv %s199
        %v784 = vmul.f32 %v783, %v615
        %v785 = vmul.f32 %v783, %v616
        %v786 = vmul.f32 %v783, %v617
        %v787 = vmul.f32 %v783, %v618
        %v788 = vstv %s203
        %v789 = vmul.f32 %v788, %v656
        %v790 = vmul.f32 %v788, %v657
        %v791 = vmul.f32 %v788, %v658
        %v792 = vmul.f32 %v788, %v659
        %v793 = vadd.f32 %v784, %v789
        %v794 = vadd.f32 %v785, %v790
        %v795 = vadd.f32 %v786, %v791
        %v796 = vadd.f32 %v787, %v792
        %v797 = vstv %s207
        %v798 = vmul.f32 %v797, %v697
        %v799 = vmul.f32 %v797, %v698
        %v800 = vmul.f32 %v797, %v699
        %v801 = vmul.f32 %v797, %v700
        %v802 = vadd.f32 %v793, %v798
        %v803 = vadd.f32 %v794, %v799
        %v804 = vadd.f32 %v795, %v800
        %v805 = vadd.f32 %v796, %v801
        %v806 = vstv %s211
        %v807 = vmul.f32 %v806, %v738
        %v808 = vmul.f32 %v806, %v739
        %v809 = vmul.f32 %v806, %v740
        %v810 = vmul.f32 %v806, %v741
        %v811 = vadd.f32 %v802, %v807
        %v812 = vadd.f32 %v803, %v808
        %v813 = vadd.f32 %v804, %v809
        %v814 = vadd.f32 %v805, %v810
        %v815 = vstv %s319
        %v816 = vadd.f32 %v811, %v815
        %v817 = vadd.f32 %v812, %v815
        %v818 = vadd.f32 %v813, %v815
        %v819 = vadd.f32 %v814, %v815
        %v820 = vmax.f32 %v816, 0.0
        %v821 = vmax.f32 %v817, 0.0
        %v822 = vmax.f32 %v818, 0.0
        %v823 = vmax.f32 %v819, 0.0
        %v824 = vstv %s200
        %v825 = vmul.f32 %v824, %v615
        %v826 = vmul.f32 %v824, %v616
        %v827 = vmul.f32 %v824, %v617
        %v828 = vmul.f32 %v824, %v618
        %v829 = vstv %s204
        %v830 = vmul.f32 %v829, %v656
        %v831 = vmul.f32 %v829, %v657
        %v832 = vmul.f32 %v829, %v658
        %v833 = vmul.f32 %v829, %v659
        %v834 = vadd.f32 %v825, %v830
        %v835 = vadd.f32 %v826, %v831
        %v836 = vadd.f32 %v827, %v832
        %v837 = vadd.f32 %v828, %v833
        %v838 = vstv %s208
        %v839 = vmul.f32 %v838, %v697
        %v840 = vmul.f32 %v838, %v698
        %v841 = vmul.f32 %v838, %v699
        %v842 = vmul.f32 %v838, %v700
        %v843 = vadd.f32 %v834, %v839
        %v844 = vadd.f32 %v835, %v840
        %v845 = vadd.f32 %v836, %v841
        %v846 = vadd.f32 %v837, %v842
        %v847 = vstv %s212
        %v848 = vmul.f32 %v847, %v738
        %v849 = vmul.f32 %v847, %v739
        %v850 = vmul.f32 %v847, %v740
        %v851 = vmul.f32 %v847, %v741
        %v852 = vadd.f32 %v843, %v848
        %v853 = vadd.f32 %v844, %v849
        %v854 = vadd.f32 %v845, %v850
        %v855 = vadd.f32 %v846, %v851
        %v856 = vstv %s320
        %v857 = vadd.f32 %v852, %v856
        %v858 = vadd.f32 %v853, %v856
        %v859 = vadd.f32 %v854, %v856
        %v860 = vadd.f32 %v855, %v856
        %v861 = vmax.f32 %v857, 0.0
        %v862 = vmax.f32 %v858, 0.0
        %v863 = vmax.f32 %v859, 0.0
        %v864 = vmax.f32 %v860, 0.0
        %v865 = vstv %s201
        %v866 = vmul.f32 %v865, %v615
        %v867 = vmul.f32 %v865, %v616
        %v868 = vmul.f32 %v865, %v617
        %v869 = vmul.f32 %v865, %v618
        %v870 = vstv %s205
        %v871 = vmul.f32 %v870, %v656
        %v872 = vmul.f32 %v870, %v657
        %v873 = vmul.f32 %v870, %v658
        %v874 = vmul.f32 %v870, %v659
        %v875 = vadd.f32 %v866, %v871
        %v876 = vadd.f32 %v867, %v872
        %v877 = vadd.f32 %v868, %v873
        %v878 = vadd.f32 %v869, %v874
        %v879 = vstv %s209
        %v880 = vmul.f32 %v879, %v697
        %v881 = vmul.f32 %v879, %v698
        %v882 = vmul.f32 %v879, %v699
        %v883 = vmul.f32 %v879, %v700
        %v884 = vadd.f32 %v875, %v880
        %v885 = vadd.f32 %v876, %v881
        %v886 = vadd.f32 %v877, %v882
        %v887 = vadd.f32 %v878, %v883
        %v888 = vstv %s213
        %v889 = vmul.f32 %v888, %v738
        %v890 = vmul.f32 %v888, %v739
        %v891 = vmul.f32 %v888, %v740
        %v892 = vmul.f32 %v888, %v741
        %v893 = vadd.f32 %v884, %v889
        %v894 = vadd.f32 %v885, %v890
        %v895 = vadd.f32 %v886, %v891
        %v896 = vadd.f32 %v887, %v892
        %v897 = vstv %s321
        %v898 = vadd.f32 %v893, %v897
        %v899 = vadd.f32 %v894, %v897
        %v900 = vadd.f32 %v895, %v897
        %v901 = vadd.f32 %v896, %v897
        %v902 = vmax.f32 %v898, 0.0
        %v903 = vmax.f32 %v899, 0.0
        %v904 = vmax.f32 %v900, 0.0
        %v905 = vmax.f32 %v901, 0.0
        %v906 = vstv %s214
        %v907 = vmul.f32 %v906, %v779
        %v908 = vmul.f32 %v906, %v780
        %v909 = vmul.f32 %v906, %v781
        %v910 = vmul.f32 %v906, %v782
        %v911 = vstv %s218
        %v912 = vmul.f32 %v911, %v820
        %v913 = vmul.f32 %v911, %v821
        %v914 = vmul.f32 %v911, %v822
        %v915 = vmul.f32 %v911, %v823
        %v916 = vadd.f32 %v907, %v912
        %v917 = vadd.f32 %v908, %v913
        %v918 = vadd.f32 %v909, %v914
        %v919 = vadd.f32 %v910, %v915
        %v920 = vstv %s222
        %v921 = vmul.f32 %v920, %v861
        %v922 = vmul.f32 %v920, %v862
        %v923 = vmul.f32 %v920, %v863
        %v924 = vmul.f32 %v920, %v864
        %v925 = vadd.f32 %v916, %v921
        %v926 = vadd.f32 %v917, %v922
        %v927 = vadd.f32 %v918, %v923
        %v928 = vadd.f32 %v919, %v924
        %v929 = vstv %s226
        %v930 = vmul.f32 %v929, %v902
        %v931 = vmul.f32 %v929, %v903
        %v932 = vmul.f32 %v929, %v904
        %v933 = vmul.f32 %v929, %v905
        %v934 = vadd.f32 %v925, %v930
        %v935 = vadd.f32 %v926, %v931
        %v936 = vadd.f32 %v927, %v932
        %v937 = vadd.f32 %v928, %v933
        %v938 = vstv %s322
        %v939 = vadd.f32 %v934, %v938
        %v940 = vadd.f32 %v935, %v938
        %v941 = vadd.f32 %v936, %v938
        %v942 = vadd.f32 %v937, %v938
        %v943 = vmax.f32 %v939, 0.0
        %v944 = vmax.f32 %v940, 0.0
        %v945 = vmax.f32 %v941, 0.0
        %v946 = vmax.f32 %v942, 0.0
        %v947 = vstv %s215
        %v948 = vmul.f32 %v947, %v779
        %v949 = vmul.f32 %v947, %v780
        %v950 = vmul.f32 %v947, %v781
        %v951 = vmul.f32 %v947, %v782
        %v952 = vstv %s219
        %v953 = vmul.f32 %v952, %v820
        %v954 = vmul.f32 %v952, %v821
        %v955 = vmul.f32 %v952, %v822
        %v956 = vmul.f32 %v952, %v823
        %v957 = vadd.f32 %v948, %v953
        %v958 = vadd.f32 %v949, %v954
        %v959 = vadd.f32 %v950, %v955
        %v960 = vadd.f32 %v951, %v956
        %v961 = vstv %s223
        %v962 = vmul.f32 %v961, %v861
        %v963 = vmul.f32 %v961, %v862
        %v964 = vmul.f32 %v961, %v863
        %v965 = vmul.f32 %v961, %v864
        %v966 = vadd.f32 %v957, %v962
        %v967 = vadd.f32 %v958, %v963
        %v968 = vadd.f32 %v959, %v964
        %v969 = vadd.f32 %v960, %v965
        %v970 = vstv %s227
        %v971 = vmul.f32 %v970, %v902
        %v972 = vmul.f32 %v970, %v903
        %v973 = vmul.f32 %v970, %v904
        %v974 = vmul.f32 %v970, %v905
        %v975 = vadd.f32 %v966, %v971
        %v976 = vadd.f32 %v967, %v972
        %v977 = vadd.f32 %v968, %v973
        %v978 = vadd.f32 %v969, %v974
        %v979 = vstv %s323
        %v980 = vadd.f32 %v975, %v979
        %v981 = vadd.f32 %v976, %v979
        %v982 = vadd.f32 %v977, %v979
        %v983 = vadd.f32 %v978, %v979
        %v984 = vmax.f32 %v980, 0.0
        %v985 = vmax.f32 %v981, 0.0
        %v986 = vmax.f32 %v982, 0.0
        %v987 = vmax.f32 %v983, 0.0
        %v988 = vstv %s216
        %v989 = vmul.f32 %v988, %v779
        %v990 = vmul.f32 %v988, %v780
        %v991 = vmul.f32 %v988, %v781
        %v992 = vmul.f32 %v988, %v782
        %v993 = vstv %s220
        %v994 = vmul.f32 %v993, %v820
        %v995 = vmul.f32 %v993, %v821
        %v996 = vmul.f32 %v993, %v822
        %v997 = vmul.f32 %v993, %v823
        %v998 = vadd.f32 %v989, %v994
        %v999 = vadd.f32 %v990, %v995
        %v1000 = vadd.f32 %v991, %v996
        %v1001 = vadd.f32 %v992, %v997
        %v1002 = vstv %s224
        %v1003 = vmul.f32 %v1002, %v861
        %v1004 = vmul.f32 %v1002, %v862
        %v1005 = vmul.f32 %v1002, %v863
        %v1006 = vmul.f32 %v1002, %v864
        %v1007 = vadd.f32 %v998, %v1003
        %v1008 = vadd.f32 %v999, %v1004
        %v1009 = vadd.f32 %v1000, %v1005
        %v1010 = vadd.f32 %v1001, %v1006
        %v1011 = vstv %s228
        %v1012 = vmul.f32 %v1011, %v902
        %v1013 = vmul.f32 %v1011, %v903
        %v1014 = vmul.f32 %v1011, %v904
        %v1015 = vmul.f32 %v1011, %v905
        %v1016 = vadd.f32 %v1007, %v1012
        %v1017 = vadd.f32 %v1008, %v1013
        %v1018 = vadd.f32 %v1009, %v1014
        %v1019 = vadd.f32 %v1010, %v1015
        %v1020 = vstv %s324
        %v1021 = vadd.f32 %v1016, %v1020
        %v1022 = vadd.f32 %v1017, %v1020
        %v1023 = vadd.f32 %v1018, %v1020
        %v1024 = vadd.f32 %v1019, %v1020
        %v1025 = vmax.f32 %v1021, 0.0
        %v1026 = vmax.f32 %v1022, 0.0
        %v1027 = vmax.f32 %v1023, 0.0
        %v1028 = vmax.f32 %v1024, 0.0
        %v1029 = vstv %s217
        %v1030 = vmul.f32 %v1029, %v779
        %v1031 = vmul.f32 %v1029, %v780
        %v1032 = vmul.f32 %v1029, %v781
        %v1033 = vmul.f32 %v1029, %v782
        %v1034 = vstv %s221
        %v1035 = vmul.f32 %v1034, %v820
        %v1036 = vmul.f32 %v1034, %v821
        %v1037 = vmul.f32 %v1034, %v822
        %v1038 = vmul.f32 %v1034, %v823
        %v1039 = vadd.f32 %v1030, %v1035
        %v1040 = vadd.f32 %v1031, %v1036
        %v1041 = vadd.f32 %v1032, %v1037
        %v1042 = vadd.f32 %v1033, %v1038
        %v1043 = vstv %s225
        %v1044 = vmul.f32 %v1043, %v861
        %v1045 = vmul.f32 %v1043, %v862
        %v1046 = vmul.f32 %v1043, %v863
        %v1047 = vmul.f32 %v1043, %v864
        %v1048 = vadd.f32 %v1039, %v1044
        %v1049 = vadd.f32 %v1040, %v1045
        %v1050 = vadd.f32 %v1041, %v1046
        %v1051 = vadd.f32 %v1042, %v1047
        %v1052 = vstv %s229
        %v1053 = vmul.f32 %v1052, %v902
        %v1054 = vmul.f32 %v1052, %v903
        %v1055 = vmul.f32 %v1052, %v904
        %v1056 = vmul.f32 %v1052, %v905
        %v1057 = vadd.f32 %v1048, %v1053
        %v1058 = vadd.f32 %v1049, %v1054
        %v1059 = vadd.f32 %v1050, %v1055
        %v1060 = vadd.f32 %v1051, %v1056
        %v1061 = vstv %s325
        %v1062 = vadd.f32 %v1057, %v1061
        %v1063 = vadd.f32 %v1058, %v1061
        %v1064 = vadd.f32 %v1059, %v1061
        %v1065 = vadd.f32 %v1060, %v1061
        %v1066 = vmax.f32 %v1062, 0.0
        %v1067 = vmax.f32 %v1063, 0.0
        %v1068 = vmax.f32 %v1064, 0.0
        %v1069 = vmax.f32 %v1065, 0.0
        %v1070 = vstv %s230
        %v1071 = vmul.f32 %v1070, %v943
        %v1072 = vmul.f32 %v1070, %v944
        %v1073 = vmul.f32 %v1070, %v945
        %v1074 = vmul.f32 %v1070, %v946
        %v1075 = vstv %s234
        %v1076 = vmul.f32 %v1075, %v984
        %v1077 = vmul.f32 %v1075, %v985
        %v1078 = vmul.f32 %v1075, %v986
        %v1079 = vmul.f32 %v1075, %v987
        %v1080 = vadd.f32 %v1071, %v1076
        %v1081 = vadd.f32 %v1072, %v1077
        %v1082 = vadd.f32 %v1073, %v1078
        %v1083 = vadd.f32 %v1074, %v1079
        %v1084 = vstv %s238
        %v1085 = vmul.f32 %v1084, %v1025
        %v1086 = vmul.f32 %v1084, %v1026
        %v1087 = vmul.f32 %v1084, %v1027
        %v1088 = vmul.f32 %v1084, %v1028
        %v1089 = vadd.f32 %v1080, %v1085
        %v1090 = vadd.f32 %v1081, %v1086
        %v1091 = vadd.f32 %v1082, %v1087
        %v1092 = vadd.f32 %v1083, %v1088
        %v1093 = vstv %s242
        %v1094 = vmul.f32 %v1093, %v1066
        %v1095 = vmul.f32 %v1093, %v1067
        %v1096 = vmul.f32 %v1093, %v1068
        %v1097 = vmul.f32 %v1093, %v1069
        %v1098 = vadd.f32 %v1089, %v1094
        %v1099 = vadd.f32 %v1090, %v1095
        %v1100 = vadd.f32 %v1091, %v1096
        %v1101 = vadd.f32 %v1092, %v1097
        %v1102 = vstv %s326
        %v1103 = vadd.f32 %v1098, %v1102
        %v1104 = vadd.f32 %v1099, %v1102
        %v1105 = vadd.f32 %v1100, %v1102
        %v1106 = vadd.f32 %v1101, %v1102
        %v1107 = vmax.f32 %v1103, 0.0
        %v1108 = vmax.f32 %v1104, 0.0
        %v1109 = vmax.f32 %v1105, 0.0
        %v1110 = vmax.f32 %v1106, 0.0
        %v1111 = vstv %s231
        %v1112 = vmul.f32 %v1111, %v943
        %v1113 = vmul.f32 %v1111, %v944
        %v1114 = vmul.f32 %v1111, %v945
        %v1115 = vmul.f32 %v1111, %v946
        %v1116 = vstv %s235
        %v1117 = vmul.f32 %v1116, %v984
        %v1118 = vmul.f32 %v1116, %v985
        %v1119 = vmul.f32 %v1116, %v986
        %v1120 = vmul.f32 %v1116, %v987
        %v1121 = vadd.f32 %v1112, %v1117
        %v1122 = vadd.f32 %v1113, %v1118
        %v1123 = vadd.f32 %v1114, %v1119
        %v1124 = vadd.f32 %v1115, %v1120
        %v1125 = vstv %s239
        %v1126 = vmul.f32 %v1125, %v1025
        %v1127 = vmul.f32 %v1125, %v1026
        %v1128 = vmul.f32 %v1125, %v1027
        %v1129 = vmul.f32 %v1125, %v1028
        %v1130 = vadd.f32 %v1121, %v1126
        %v1131 = vadd.f32 %v1122, %v1127
        %v1132 = vadd.f32 %v1123, %v1128
        %v1133 = vadd.f32 %v1124, %v1129
        %v1134 = vstv %s243
        %v1135 = vmul.f32 %v1134, %v1066
        %v1136 = vmul.f32 %v1134, %v1067
        %v1137 = vmul.f32 %v1134, %v1068
        %v1138 = vmul.f32 %v1134, %v1069
        %v1139 = vadd.f32 %v1130, %v1135
        %v1140 = vadd.f32 %v1131, %v1136
        %v1141 = vadd.f32 %v1132, %v1137
        %v1142 = vadd.f32 %v1133, %v1138
        %v1143 = vstv %s327
        %v1144 = vadd.f32 %v1139, %v1143
        %v1145 = vadd.f32 %v1140, %v1143
        %v1146 = vadd.f32 %v1141, %v1143
        %v1147 = vadd.f32 %v1142, %v1143
        %v1148 = vmax.f32 %v1144, 0.0
        %v1149 = vmax.f32 %v1145, 0.0
        %v1150 = vmax.f32 %v1146, 0.0
        %v1151 = vmax.f32 %v1147, 0.0
        %v1152 = vstv %s232
        %v1153 = vmul.f32 %v1152, %v943
        %v1154 = vmul.f32 %v1152, %v944
        %v1155 = vmul.f32 %v1152, %v945
        %v1156 = vmul.f32 %v1152, %v946
        %v1157 = vstv %s236
        %v1158 = vmul.f32 %v1157, %v984
        %v1159 = vmul.f32 %v1157, %v985
        %v1160 = vmul.f32 %v1157, %v986
        %v1161 = vmul.f32 %v1157, %v987
        %v1162 = vadd.f32 %v1153, %v1158
        %v1163 = vadd.f32 %v1154, %v1159
        %v1164 = vadd.f32 %v1155, %v1160
        %v1165 = vadd.f32 %v1156, %v1161
        %v1166 = vstv %s240
        %v1167 = vmul.f32 %v1166, %v1025
        %v1168 = vmul.f32 %v1166, %v1026
        %v1169 = vmul.f32 %v1166, %v1027
        %v1170 = vmul.f32 %v1166, %v1028
        %v1171 = vadd.f32 %v1162, %v1167
        %v1172 = vadd.f32 %v1163, %v1168
        %v1173 = vadd.f32 %v1164, %v1169
        %v1174 = vadd.f32 %v1165, %v1170
        %v1175 = vstv %s244
        %v1176 = vmul.f32 %v1175, %v1066
        %v1177 = vmul.f32 %v1175, %v1067
        %v1178 = vmul.f32 %v1175, %v1068
        %v1179 = vmul.f32 %v1175, %v1069
        %v1180 = vadd.f32 %v1171, %v1176
        %v1181 = vadd.f32 %v1172, %v1177
        %v1182 = vadd.f32 %v1173, %v1178
        %v1183 = vadd.f32 %v1174, %v1179
        %v1184 = vstv %s328
        %v1185 = vadd.f32 %v1180, %v1184
        %v1186 = vadd.f32 %v1181, %v1184
        %v1187 = vadd.f32 %v1182, %v1184
        %v1188 = vadd.f32 %v1183, %v1184
        %v1189 = vmax.f32 %v1185, 0.0
        %v1190 = vmax.f32 %v1186, 0.0
        %v1191 = vmax.f32 %v1187, 0.0
        %v1192 = vmax.f32 %v1188, 0.0
        %v1193 = vstv %s233
        %v1194 = vmul.f32 %v1193, %v943
        %v1195 = vmul.f32 %v1193, %v944
        %v1196 = vmul.f32 %v1193, %v945
        %v1197 = vmul.f32 %v1193, %v946
        %v1198 = vstv %s237
        %v1199 = vmul.f32 %v1198, %v984
        %v1200 = vmul.f32 %v1198, %v985
        %v1201 = vmul.f32 %v1198, %v986
        %v1202 = vmul.f32 %v1198, %v987
        %v1203 = vadd.f32 %v1194, %v1199
        %v1204 = vadd.f32 %v1195, %v1200
        %v1205 = vadd.f32 %v1196, %v1201
        %v1206 = vadd.f32 %v1197, %v1202
        %v1207 = vstv %s241
        %v1208 = vmul.f32 %v1207, %v1025
        %v1209 = vmul.f32 %v1207, %v1026
        %v1210 = vmul.f32 %v1207, %v1027
        %v1211 = vmul.f32 %v1207, %v1028
        %v1212 = vadd.f32 %v1203, %v1208
        %v1213 = vadd.f32 %v1204, %v1209
        %v1214 = vadd.f32 %v1205, %v1210
        %v1215 = vadd.f32 %v1206, %v1211
        %v1216 = vstv %s245
        %v1217 = vmul.f32 %v1216, %v1066
        %v1218 = vmul.f32 %v1216, %v1067
        %v1219 = vmul.f32 %v1216, %v1068
        %v1220 = vmul.f32 %v1216, %v1069
        %v1221 = vadd.f32 %v1212, %v1217
        %v1222 = vadd.f32 %v1213, %v1218
        %v1223 = vadd.f32 %v1214, %v1219
        %v1224 = vadd.f32 %v1215, %v1220
        %v1225 = vstv %s329
        %v1226 = vadd.f32 %v1221, %v1225
        %v1227 = vadd.f32 %v1222, %v1225
        %v1228 = vadd.f32 %v1223, %v1225
        %v1229 = vadd.f32 %v1224, %v1225
        %v1230 = vmax.f32 %v1226, 0.0
        %v1231 = vmax.f32 %v1227, 0.0
        %v1232 = vmax.f32 %v1228, 0.0
        %v1233 = vmax.f32 %v1229, 0.0
        %v1234 = vstv %s246
        %v1235 = vmul.f32 %v1234, %v1107
        %v1236 = vmul.f32 %v1234, %v1108
        %v1237 = vmul.f32 %v1234, %v1109
        %v1238 = vmul.f32 %v1234, %v1110
        %v1239 = vstv %s250
        %v1240 = vmul.f32 %v1239, %v1148
        %v1241 = vmul.f32 %v1239, %v1149
        %v1242 = vmul.f32 %v1239, %v1150
        %v1243 = vmul.f32 %v1239, %v1151
        %v1244 = vadd.f32 %v1235, %v1240
        %v1245 = vadd.f32 %v1236, %v1241
        %v1246 = vadd.f32 %v1237, %v1242
        %v1247 = vadd.f32 %v1238, %v1243
        %v1248 = vstv %s254
        %v1249 = vmul.f32 %v1248, %v1189
        %v1250 = vmul.f32 %v1248, %v1190
        %v1251 = vmul.f32 %v1248, %v1191
        %v1252 = vmul.f32 %v1248, %v1192
        %v1253 = vadd.f32 %v1244, %v1249
        %v1254 = vadd.f32 %v1245, %v1250
        %v1255 = vadd.f32 %v1246, %v1251
        %v1256 = vadd.f32 %v1247, %v1252
        %v1257 = vstv %s258
        %v1258 = vmul.f32 %v1257, %v1230
        %v1259 = vmul.f32 %v1257, %v1231
        %v1260 = vmul.f32 %v1257, %v1232
        %v1261 = vmul.f32 %v1257, %v1233
        %v1262 = vadd.f32 %v1253, %v1258
        %v1263 = vadd.f32 %v1254, %v1259
        %v1264 = vadd.f32 %v1255, %v1260
        %v1265 = vadd.f32 %v1256, %v1261
        %v1266 = vstv %s330
        %v1267 = vadd.f32 %v1262, %v1266
        %v1268 = vadd.f32 %v1263, %v1266
        %v1269 = vadd.f32 %v1264, %v1266
        %v1270 = vadd.f32 %v1265, %v1266
        %v1271 = vmax.f32 %v1267, 0.0
        %v1272 = vmax.f32 %v1268, 0.0
        %v1273 = vmax.f32 %v1269, 0.0
        %v1274 = vmax.f32 %v1270, 0.0
        %v1275 = vstv %s247
        %v1276 = vmul.f32 %v1275, %v1107
        %v1277 = vmul.f32 %v1275, %v1108
        %v1278 = vmul.f32 %v1275, %v1109
        %v1279 = vmul.f32 %v1275, %v1110
        %v1280 = vstv %s251
        %v1281 = vmul.f32 %v1280, %v1148
        %v1282 = vmul.f32 %v1280, %v1149
        %v1283 = vmul.f32 %v1280, %v1150
        %v1284 = vmul.f32 %v1280, %v1151
        %v1285 = vadd.f32 %v1276, %v1281
        %v1286 = vadd.f32 %v1277, %v1282
        %v1287 = vadd.f32 %v1278, %v1283
        %v1288 = vadd.f32 %v1279, %v1284
        %v1289 = vstv %s255
        %v1290 = vmul.f32 %v1289, %v1189
        %v1291 = vmul.f32 %v1289, %v1190
        %v1292 = vmul.f32 %v1289, %v1191
        %v1293 = vmul.f32 %v1289, %v1192
        %v1294 = vadd.f32 %v1285, %v1290
        %v1295 = vadd.f32 %v1286, %v1291
        %v1296 = vadd.f32 %v1287, %v1292
        %v1297 = vadd.f32 %v1288, %v1293
        %v1298 = vstv %s259
        %v1299 = vmul.f32 %v1298, %v1230
        %v1300 = vmul.f32 %v1298, %v1231
        %v1301 = vmul.f32 %v1298, %v1232
        %v1302 = vmul.f32 %v1298, %v1233
        %v1303 = vadd.f32 %v1294, %v1299
        %v1304 = vadd.f32 %v1295, %v1300
        %v1305 = vadd.f32 %v1296, %v1301
        %v1306 = vadd.f32 %v1297, %v1302
        %v1307 = vstv %s331
        %v1308 = vadd.f32 %v1303, %v1307
        %v1309 = vadd.f32 %v1304, %v1307
        %v1310 = vadd.f32 %v1305, %v1307
        %v1311 = vadd.f32 %v1306, %v1307
        %v1312 = vmax.f32 %v1308, 0.0
        %v1313 = vmax.f32 %v1309, 0.0
        %v1314 = vmax.f32 %v1310, 0.0
        %v1315 = vmax.f32 %v1311, 0.0
        %v1316 = vstv %s248
        %v1317 = vmul.f32 %v1316, %v1107
        %v1318 = vmul.f32 %v1316, %v1108
        %v1319 = vmul.f32 %v1316, %v1109
        %v1320 = vmul.f32 %v1316, %v1110
        %v1321 = vstv %s252
        %v1322 = vmul.f32 %v1321, %v1148
        %v1323 = vmul.f32 %v1321, %v1149
        %v1324 = vmul.f32 %v1321, %v1150
        %v1325 = vmul.f32 %v1321, %v1151
        %v1326 = vadd.f32 %v1317, %v1322
        %v1327 = vadd.f32 %v1318, %v1323
        %v1328 = vadd.f32 %v1319, %v1324
        %v1329 = vadd.f32 %v1320, %v1325
        %v1330 = vstv %s256
        %v1331 = vmul.f32 %v1330, %v1189
        %v1332 = vmul.f32 %v1330, %v1190
        %v1333 = vmul.f32 %v1330, %v1191
        %v1334 = vmul.f32 %v1330, %v1192
        %v1335 = vadd.f32 %v1326, %v1331
        %v1336 = vadd.f32 %v1327, %v1332
        %v1337 = vadd.f32 %v1328, %v1333
        %v1338 = vadd.f32 %v1329, %v1334
        %v1339 = vstv %s260
        %v1340 = vmul.f32 %v1339, %v1230
        %v1341 = vmul.f32 %v1339, %v1231
        %v1342 = vmul.f32 %v1339, %v1232
        %v1343 = vmul.f32 %v1339, %v1233
        %v1344 = vadd.f32 %v1335, %v1340
        %v1345 = vadd.f32 %v1336, %v1341
        %v1346 = vadd.f32 %v1337, %v1342
        %v1347 = vadd.f32 %v1338, %v1343
        %v1348 = vstv %s332
        %v1349 = vadd.f32 %v1344, %v1348
        %v1350 = vadd.f32 %v1345, %v1348
        %v1351 = vadd.f32 %v1346, %v1348
        %v1352 = vadd.f32 %v1347, %v1348
        %v1353 = vmax.f32 %v1349, 0.0
        %v1354 = vmax.f32 %v1350, 0.0
        %v1355 = vmax.f32 %v1351, 0.0
        %v1356 = vmax.f32 %v1352, 0.0
        %v1357 = vstv %s249
        %v1358 = vmul.f32 %v1357, %v1107
        %v1359 = vmul.f32 %v1357, %v1108
        %v1360 = vmul.f32 %v1357, %v1109
        %v1361 = vmul.f32 %v1357, %v1110
        %v1362 = vstv %s253
        %v1363 = vmul.f32 %v1362, %v1148
        %v1364 = vmul.f32 %v1362, %v1149
        %v1365 = vmul.f32 %v1362, %v1150
        %v1366 = vmul.f32 %v1362, %v1151
        %v1367 = vadd.f32 %v1358, %v1363
        %v1368 = vadd.f32 %v1359, %v1364
        %v1369 = vadd.f32 %v1360, %v1365
        %v1370 = vadd.f32 %v1361, %v1366
        %v1371 = vstv %s257
        %v1372 = vmul.f32 %v1371, %v1189
        %v1373 = vmul.f32 %v1371, %v1190
        %v1374 = vmul.f32 %v1371, %v1191
        %v1375 = vmul.f32 %v1371, %v1192
        %v1376 = vadd.f32 %v1367, %v1372
        %v1377 = vadd.f32 %v1368, %v1373
        %v1378 = vadd.f32 %v1369, %v1374
        %v1379 = vadd.f32 %v1370, %v1375
        %v1380 = vstv %s261
        %v1381 = vmul.f32 %v1380, %v1230
        %v1382 = vmul.f32 %v1380, %v1231
        %v1383 = vmul.f32 %v1380, %v1232
        %v1384 = vmul.f32 %v1380, %v1233
        %v1385 = vadd.f32 %v1376, %v1381
        %v1386 = vadd.f32 %v1377, %v1382
        %v1387 = vadd.f32 %v1378, %v1383
        %v1388 = vadd.f32 %v1379, %v1384
        %v1389 = vstv %s333
        %v1390 = vadd.f32 %v1385, %v1389
        %v1391 = vadd.f32 %v1386, %v1389
        %v1392 = vadd.f32 %v1387, %v1389
        %v1393 = vadd.f32 %v1388, %v1389
        %v1394 = vmax.f32 %v1390, 0.0
        %v1395 = vmax.f32 %v1391, 0.0
        %v1396 = vmax.f32 %v1392, 0.0
        %v1397 = vmax.f32 %v1393, 0.0
        %v1398 = vstv %s262
        %v1399 = vmul.f32 %v1398, %v1271
        %v1400 = vmul.f32 %v1398, %v1272
        %v1401 = vmul.f32 %v1398, %v1273
        %v1402 = vmul.f32 %v1398, %v1274
        %v1403 = vstv %s266
        %v1404 = vmul.f32 %v1403, %v1312
        %v1405 = vmul.f32 %v1403, %v1313
        %v1406 = vmul.f32 %v1403, %v1314
        %v1407 = vmul.f32 %v1403, %v1315
        %v1408 = vadd.f32 %v1399, %v1404
        %v1409 = vadd.f32 %v1400, %v1405
        %v1410 = vadd.f32 %v1401, %v1406
        %v1411 = vadd.f32 %v1402, %v1407
        %v1412 = vstv %s270
        %v1413 = vmul.f32 %v1412, %v1353
        %v1414 = vmul.f32 %v1412, %v1354
        %v1415 = vmul.f32 %v1412, %v1355
        %v1416 = vmul.f32 %v1412, %v1356
        %v1417 = vadd.f32 %v1408, %v1413
        %v1418 = vadd.f32 %v1409, %v1414
        %v1419 = vadd.f32 %v1410, %v1415
        %v1420 = vadd.f32 %v1411, %v1416
        %v1421 = vstv %s274
        %v1422 = vmul.f32 %v1421, %v1394
        %v1423 = vmul.f32 %v1421, %v1395
        %v1424 = vmul.f32 %v1421, %v1396
        %v1425 = vmul.f32 %v1421, %v1397
        %v1426 = vadd.f32 %v1417, %v1422
        %v1427 = vadd.f32 %v1418, %v1423
        %v1428 = vadd.f32 %v1419, %v1424
        %v1429 = vadd.f32 %v1420, %v1425
        %v1430 = vstv %s334
        %v1431 = vadd.f32 %v1426, %v1430
        %v1432 = vadd.f32 %v1427, %v1430
        %v1433 = vadd.f32 %v1428, %v1430
        %v1434 = vadd.f32 %v1429, %v1430
        %v1435 = vmax.f32 %v1431, 0.0
        %v1436 = vmax.f32 %v1432, 0.0
        %v1437 = vmax.f32 %v1433, 0.0
        %v1438 = vmax.f32 %v1434, 0.0
        %v1439 = vstv %s263
        %v1440 = vmul.f32 %v1439, %v1271
        %v1441 = vmul.f32 %v1439, %v1272
        %v1442 = vmul.f32 %v1439, %v1273
        %v1443 = vmul.f32 %v1439, %v1274
        %v1444 = vstv %s267
        %v1445 = vmul.f32 %v1444, %v1312
        %v1446 = vmul.f32 %v1444, %v1313
        %v1447 = vmul.f32 %v1444, %v1314
        %v1448 = vmul.f32 %v1444, %v1315
        %v1449 = vadd.f32 %v1440, %v1445
        %v1450 = vadd.f32 %v1441, %v1446
        %v1451 = vadd.f32 %v1442, %v1447
        %v1452 = vadd.f32 %v1443, %v1448
        %v1453 = vstv %s271
        %v1454 = vmul.f32 %v1453, %v1353
        %v1455 = vmul.f32 %v1453, %v1354
        %v1456 = vmul.f32 %v1453, %v1355
        %v1457 = vmul.f32 %v1453, %v1356
        %v1458 = vadd.f32 %v1449, %v1454
        %v1459 = vadd.f32 %v1450, %v1455
        %v1460 = vadd.f32 %v1451, %v1456
        %v1461 = vadd.f32 %v1452, %v1457
        %v1462 = vstv %s275
        %v1463 = vmul.f32 %v1462, %v1394
        %v1464 = vmul.f32 %v1462, %v1395
        %v1465 = vmul.f32 %v1462, %v1396
        %v1466 = vmul.f32 %v1462, %v1397
        %v1467 = vadd.f32 %v1458, %v1463
        %v1468 = vadd.f32 %v1459, %v1464
        %v1469 = vadd.f32 %v1460, %v1465
        %v1470 = vadd.f32 %v1461, %v1466
        %v1471 = vstv %s335
        %v1472 = vadd.f32 %v1467, %v1471
        %v1473 = vadd.f32 %v1468, %v1471
        %v1474 = vadd.f32 %v1469, %v1471
        %v1475 = vadd.f32 %v1470, %v1471
        %v1476 = vmax.f32 %v1472, 0.0
        %v1477 = vmax.f32 %v1473, 0.0
        %v1478 = vmax.f32 %v1474, 0.0
        %v1479 = vmax.f32 %v1475, 0.0
        %v1480 = vstv %s264
        %v1481 = vmul.f32 %v1480, %v1271
        %v1482 = vmul.f32 %v1480, %v1272
        %v1483 = vmul.f32 %v1480, %v1273
        %v1484 = vmul.f32 %v1480, %v1274
        %v1485 = vstv %s268
        %v1486 = vmul.f32 %v1485, %v1312
        %v1487 = vmul.f32 %v1485, %v1313
        %v1488 = vmul.f32 %v1485, %v1314
        %v1489 = vmul.f32 %v1485, %v1315
        %v1490 = vadd.f32 %v1481, %v1486
        %v1491 = vadd.f32 %v1482, %v1487
        %v1492 = vadd.f32 %v1483, %v1488
        %v1493 = vadd.f32 %v1484, %v1489
        %v1494 = vstv %s272
        %v1495 = vmul.f32 %v1494, %v1353
        %v1496 = vmul.f32 %v1494, %v1354
        %v1497 = vmul.f32 %v1494, %v1355
        %v1498 = vmul.f32 %v1494, %v1356
        %v1499 = vadd.f32 %v1490, %v1495
        %v1500 = vadd.f32 %v1491, %v1496
        %v1501 = vadd.f32 %v1492, %v1497
        %v1502 = vadd.f32 %v1493, %v1498
        %v1503 = vstv %s276
        %v1504 = vmul.f32 %v1503, %v1394
        %v1505 = vmul.f32 %v1503, %v1395
        %v1506 = vmul.f32 %v1503, %v1396
        %v1507 = vmul.f32 %v1503, %v1397
        %v1508 = vadd.f32 %v1499, %v1504
        %v1509 = vadd.f32 %v1500, %v1505
        %v1510 = vadd.f32 %v1501, %v1506
        %v1511 = vadd.f32 %v1502, %v1507
        %v1512 = vstv %s336
        %v1513 = vadd.f32 %v1508, %v1512
        %v1514 = vadd.f32 %v1509, %v1512
        %v1515 = vadd.f32 %v1510, %v1512
        %v1516 = vadd.f32 %v1511, %v1512
        %v1517 = vmax.f32 %v1513, 0.0
        %v1518 = vmax.f32 %v1514, 0.0
        %v1519 = vmax.f32 %v1515, 0.0
        %v1520 = vmax.f32 %v1516, 0.0
        %v1521 = vstv %s265
        %v1522 = vmul.f32 %v1521, %v1271
        %v1523 = vmul.f32 %v1521, %v1272
        %v1524 = vmul.f32 %v1521, %v1273
        %v1525 = vmul.f32 %v1521, %v1274
        %v1526 = vstv %s269
        %v1527 = vmul.f32 %v1526, %v1312
        %v1528 = vmul.f32 %v1526, %v1313
        %v1529 = vmul.f32 %v1526, %v1314
        %v1530 = vmul.f32 %v1526, %v1315
        %v1531 = vadd.f32 %v1522, %v1527
        %v1532 = vadd.f32 %v1523, %v1528
        %v1533 = vadd.f32 %v1524, %v1529
        %v1534 = vadd.f32 %v1525, %v1530
        %v1535 = vstv %s273
        %v1536 = vmul.f32 %v1535, %v1353
        %v1537 = vmul.f32 %v1535, %v1354
        %v1538 = vmul.f32 %v1535, %v1355
        %v1539 = vmul.f32 %v1535, %v1356
        %v1540 = vadd.f32 %v1531, %v1536
        %v1541 = vadd.f32 %v1532, %v1537
        %v1542 = vadd.f32 %v1533, %v1538
        %v1543 = vadd.f32 %v1534, %v1539
        %v1544 = vstv %s277
        %v1545 = vmul.f32 %v1544, %v1394
        %v1546 = vmul.f32 %v1544, %v1395
        %v1547 = vmul.f32 %v1544, %v1396
        %v1548 = vmul.f32 %v1544, %v1397
        %v1549 = vadd.f32 %v1540, %v1545
        %v1550 = vadd.f32 %v1541, %v1546
        %v1551 = vadd.f32 %v1542, %v1547
        %v1552 = vadd.f32 %v1543, %v1548
        %v1553 = vstv %s337
        %v1554 = vadd.f32 %v1549, %v1553
        %v1555 = vadd.f32 %v1550, %v1553
        %v1556 = vadd.f32 %v1551, %v1553
        %v1557 = vadd.f32 %v1552, %v1553
        %v1558 = vmax.f32 %v1554, 0.0
        %v1559 = vmax.f32 %v1555, 0.0
        %v1560 = vmax.f32 %v1556, 0.0
        %v1561 = vmax.f32 %v1557, 0.0
        %v1562 = vstv %s278
        %v1563 = vmul.f32 %v1562, %v1435
        %v1564 = vmul.f32 %v1562, %v1436
        %v1565 = vmul.f32 %v1562, %v1437
        %v1566 = vmul.f32 %v1562, %v1438
        %v1567 = vstv %s282
        %v1568 = vmul.f32 %v1567, %v1476
        %v1569 = vmul.f32 %v1567, %v1477
        %v1570 = vmul.f32 %v1567, %v1478
        %v1571 = vmul.f32 %v1567, %v1479
        %v1572 = vadd.f32 %v1563, %v1568
        %v1573 = vadd.f32 %v1564, %v1569
        %v1574 = vadd.f32 %v1565, %v1570
        %v1575 = vadd.f32 %v1566, %v1571
        %v1576 = vstv %s286
        %v1577 = vmul.f32 %v1576, %v1517
        %v1578 = vmul.f32 %v1576, %v1518
        %v1579 = vmul.f32 %v1576, %v1519
        %v1580 = vmul.f32 %v1576, %v1520
        %v1581 = vadd.f32 %v1572, %v1577
        %v1582 = vadd.f32 %v1573, %v1578
        %v1583 = vadd.f32 %v1574, %v1579
        %v1584 = vadd.f32 %v1575, %v1580
        %v1585 = vstv %s290
        %v1586 = vmul.f32 %v1585, %v1558
        %v1587 = vmul.f32 %v1585, %v1559
        %v1588 = vmul.f32 %v1585, %v1560
        %v1589 = vmul.f32 %v1585, %v1561
        %v1590 = vadd.f32 %v1581, %v1586
        %v1591 = vadd.f32 %v1582, %v1587
        %v1592 = vadd.f32 %v1583, %v1588
        %v1593 = vadd.f32 %v1584, %v1589
        %v1594 = vstv %s338
        %v1595 = vadd.f32 %v1590, %v1594
        %v1596 = vadd.f32 %v1591, %v1594
        %v1597 = vadd.f32 %v1592, %v1594
        %v1598 = vadd.f32 %v1593, %v1594
        %v1599 = vmax.f32 %v1595, 0.0
        %v1600 = vmax.f32 %v1596, 0.0
        %v1601 = vmax.f32 %v1597, 0.0
        %v1602 = vmax.f32 %v1598, 0.0
        %v1603 = vstv %s279
        %v1604 = vmul.f32 %v1603, %v1435
        %v1605 = vmul.f32 %v1603, %v1436
        %v1606 = vmul.f32 %v1603, %v1437
        %v1607 = vmul.f32 %v1603, %v1438
        %v1608 = vstv %s283
        %v1609 = vmul.f32 %v1608, %v1476
        %v1610 = vmul.f32 %v1608, %v1477
        %v1611 = vmul.f32 %v1608, %v1478
        %v1612 = vmul.f32 %v1608, %v1479
        %v1613 = vadd.f32 %v1604, %v1609
        %v1614 = vadd.f32 %v1605, %v1610
        %v1615 = vadd.f32 %v1606, %v1611
        %v1616 = vadd.f32 %v1607, %v1612
        %v1617 = vstv %s287
        %v1618 = vmul.f32 %v1617, %v1517
        %v1619 = vmul.f32 %v1617, %v1518
        %v1620 = vmul.f32 %v1617, %v1519
        %v1621 = vmul.f32 %v1617, %v1520
        %v1622 = vadd.f32 %v1613, %v1618
        %v1623 = vadd.f32 %v1614, %v1619
        %v1624 = vadd.f32 %v1615, %v1620
        %v1625 = vadd.f32 %v1616, %v1621
        %v1626 = vstv %s291
        %v1627 = vmul.f32 %v1626, %v1558
        %v1628 = vmul.f32 %v1626, %v1559
        %v1629 = vmul.f32 %v1626, %v1560
        %v1630 = vmul.f32 %v1626, %v1561
        %v1631 = vadd.f32 %v1622, %v1627
        %v1632 = vadd.f32 %v1623, %v1628
        %v1633 = vadd.f32 %v1624, %v1629
        %v1634 = vadd.f32 %v1625, %v1630
        %v1635 = vstv %s339
        %v1636 = vadd.f32 %v1631, %v1635
        %v1637 = vadd.f32 %v1632, %v1635
        %v1638 = vadd.f32 %v1633, %v1635
        %v1639 = vadd.f32 %v1634, %v1635
        %v1640 = vmax.f32 %v1636, 0.0
        %v1641 = vmax.f32 %v1637, 0.0
        %v1642 = vmax.f32 %v1638, 0.0
        %v1643 = vmax.f32 %v1639, 0.0
        %v1644 = vstv %s280
        %v1645 = vmul.f32 %v1644, %v1435
        %v1646 = vmul.f32 %v1644, %v1436
        %v1647 = vmul.f32 %v1644, %v1437
        %v1648 = vmul.f32 %v1644, %v1438
        %v1649 = vstv %s284
        %v1650 = vmul.f32 %v1649, %v1476
        %v1651 = vmul.f32 %v1649, %v1477
        %v1652 = vmul.f32 %v1649, %v1478
        %v1653 = vmul.f32 %v1649, %v1479
        %v1654 = vadd.f32 %v1645, %v1650
        %v1655 = vadd.f32 %v1646, %v1651
        %v1656 = vadd.f32 %v1647, %v1652
        %v1657 = vadd.f32 %v1648, %v1653
        %v1658 = vstv %s288
        %v1659 = vmul.f32 %v1658, %v1517
        %v1660 = vmul.f32 %v1658, %v1518
        %v1661 = vmul.f32 %v1658, %v1519
        %v1662 = vmul.f32 %v1658, %v1520
        %v1663 = vadd.f32 %v1654, %v1659
        %v1664 = vadd.f32 %v1655, %v1660
        %v1665 = vadd.f32 %v1656, %v1661
        %v1666 = vadd.f32 %v1657, %v1662
        %v1667 = vstv %s292
        %v1668 = vmul.f32 %v1667, %v1558
        %v1669 = vmul.f32 %v1667, %v1559
        %v1670 = vmul.f32 %v1667, %v1560
        %v1671 = vmul.f32 %v1667, %v1561
        %v1672 = vadd.f32 %v1663, %v1668
        %v1673 = vadd.f32 %v1664, %v1669
        %v1674 = vadd.f32 %v1665, %v1670
        %v1675 = vadd.f32 %v1666, %v1671
        %v1676 = vstv %s340
        %v1677 = vadd.f32 %v1672, %v1676
        %v1678 = vadd.f32 %v1673, %v1676
        %v1679 = vadd.f32 %v1674, %v1676
        %v1680 = vadd.f32 %v1675, %v1676
        %v1681 = vmax.f32 %v1677, 0.0
        %v1682 = vmax.f32 %v1678, 0.0
        %v1683 = vmax.f32 %v1679, 0.0
        %v1684 = vmax.f32 %v1680, 0.0
        %v1685 = vstv %s281
        %v1686 = vmul.f32 %v1685, %v1435
        %v1687 = vmul.f32 %v1685, %v1436
        %v1688 = vmul.f32 %v1685, %v1437
        %v1689 = vmul.f32 %v1685, %v1438
        %v1690 = vstv %s285
        %v1691 = vmul.f32 %v1690, %v1476
        %v1692 = vmul.f32 %v1690, %v1477
        %v1693 = vmul.f32 %v1690, %v1478
        %v1694 = vmul.f32 %v1690, %v1479
        %v1695 = vadd.f32 %v1686, %v1691
        %v1696 = vadd.f32 %v1687, %v1692
        %v1697 = vadd.f32 %v1688, %v1693
        %v1698 = vadd.f32 %v1689, %v1694
        %v1699 = vstv %s289
        %v1700 = vmul.f32 %v1699, %v1517
        %v1701 = vmul.f32 %v1699, %v1518
        %v1702 = vmul.f32 %v1699, %v1519
        %v1703 = vmul.f32 %v1699, %v1520
        %v1704 = vadd.f32 %v1695, %v1700
        %v1705 = vadd.f32 %v1696, %v1701
        %v1706 = vadd.f32 %v1697, %v1702
        %v1707 = vadd.f32 %v1698, %v1703
        %v1708 = vstv %s293
        %v1709 = vmul.f32 %v1708, %v1558
        %v1710 = vmul.f32 %v1708, %v1559
        %v1711 = vmul.f32 %v1708, %v1560
        %v1712 = vmul.f32 %v1708, %v1561
        %v1713 = vadd.f32 %v1704, %v1709
        %v1714 = vadd.f32 %v1705, %v1710
        %v1715 = vadd.f32 %v1706, %v1711
        %v1716 = vadd.f32 %v1707, %v1712
        %v1717 = vstv %s341
        %v1718 = vadd.f32 %v1713, %v1717
        %v1719 = vadd.f32 %v1714, %v1717
        %v1720 = vadd.f32 %v1715, %v1717
        %v1721 = vadd.f32 %v1716, %v1717
        %v1722 = vmax.f32 %v1718, 0.0
        %v1723 = vmax.f32 %v1719, 0.0
        %v1724 = vmax.f32 %v1720, 0.0
        %v1725 = vmax.f32 %v1721, 0.0
        %v1726 = vstv %s294
        %v1727 = vmul.f32 %v1726, %v1599
        %v1728 = vmul.f32 %v1726, %v1600
        %v1729 = vmul.f32 %v1726, %v1601
        %v1730 = vmul.f32 %v1726, %v1602
        %v1731 = vstv %s298
        %v1732 = vmul.f32 %v1731, %v1640
        %v1733 = vmul.f32 %v1731, %v1641
        %v1734 = vmul.f32 %v1731, %v1642
        %v1735 = vmul.f32 %v1731, %v1643
        %v1736 = vadd.f32 %v1727, %v1732
        %v1737 = vadd.f32 %v1728, %v1733
        %v1738 = vadd.f32 %v1729, %v1734
        %v1739 = vadd.f32 %v1730, %v1735
        %v1740 = vstv %s302
        %v1741 = vmul.f32 %v1740, %v1681
        %v1742 = vmul.f32 %v1740, %v1682
        %v1743 = vmul.f32 %v1740, %v1683
        %v1744 = vmul.f32 %v1740, %v1684
        %v1745 = vadd.f32 %v1736, %v1741
        %v1746 = vadd.f32 %v1737, %v1742
        %v1747 = vadd.f32 %v1738, %v1743
        %v1748 = vadd.f32 %v1739, %v1744
        %v1749 = vstv %s306
        %v1750 = vmul.f32 %v1749, %v1722
        %v1751 = vmul.f32 %v1749, %v1723
        %v1752 = vmul.f32 %v1749, %v1724
        %v1753 = vmul.f32 %v1749, %v1725
        %v1754 = vadd.f32 %v1745, %v1750
        %v1755 = vadd.f32 %v1746, %v1751
        %v1756 = vadd.f32 %v1747, %v1752
        %v1757 = vadd.f32 %v1748, %v1753
        %v1758 = vstv %s342
        %v1759 = vadd.f32 %v1754, %v1758
        %v1760 = vadd.f32 %v1755, %v1758
        %v1761 = vadd.f32 %v1756, %v1758
        %v1762 = vadd.f32 %v1757, %v1758
        %v1763 = vmax.f32 %v1759, 0.0
        %v1764 = vmax.f32 %v1760, 0.0
        %v1765 = vmax.f32 %v1761, 0.0
        %v1766 = vmax.f32 %v1762, 0.0
        %v1767 = vstv %s295
        %v1768 = vmul.f32 %v1767, %v1599
        %v1769 = vmul.f32 %v1767, %v1600
        %v1770 = vmul.f32 %v1767, %v1601
        %v1771 = vmul.f32 %v1767, %v1602
        %v1772 = vstv %s299
        %v1773 = vmul.f32 %v1772, %v1640
        %v1774 = vmul.f32 %v1772, %v1641
        %v1775 = vmul.f32 %v1772, %v1642
        %v1776 = vmul.f32 %v1772, %v1643
        %v1777 = vadd.f32 %v1768, %v1773
        %v1778 = vadd.f32 %v1769, %v1774
        %v1779 = vadd.f32 %v1770, %v1775
        %v1780 = vadd.f32 %v1771, %v1776
        %v1781 = vstv %s303
        %v1782 = vmul.f32 %v1781, %v1681
        %v1783 = vmul.f32 %v1781, %v1682
        %v1784 = vmul.f32 %v1781, %v1683
        %v1785 = vmul.f32 %v1781, %v1684
        %v1786 = vadd.f32 %v1777, %v1782
        %v1787 = vadd.f32 %v1778, %v1783
        %v1788 = vadd.f32 %v1779, %v1784
        %v1789 = vadd.f32 %v1780, %v1785
        %v1790 = vstv %s307
        %v1791 = vmul.f32 %v1790, %v1722
        %v1792 = vmul.f32 %v1790, %v1723
        %v1793 = vmul.f32 %v1790, %v1724
        %v1794 = vmul.f32 %v1790, %v1725
        %v1795 = vadd.f32 %v1786, %v1791
        %v1796 = vadd.f32 %v1787, %v1792
        %v1797 = vadd.f32 %v1788, %v1793
        %v1798 = vadd.f32 %v1789, %v1794
        %v1799 = vstv %s343
        %v1800 = vadd.f32 %v1795, %v1799
        %v1801 = vadd.f32 %v1796, %v1799
        %v1802 = vadd.f32 %v1797, %v1799
        %v1803 = vadd.f32 %v1798, %v1799
        %v1804 = vmax.f32 %v1800, 0.0
        %v1805 = vmax.f32 %v1801, 0.0
        %v1806 = vmax.f32 %v1802, 0.0
        %v1807 = vmax.f32 %v1803, 0.0
        %v1808 = vstv %s296
        %v1809 = vmul.f32 %v1808, %v1599
        %v1810 = vmul.f32 %v1808, %v1600
        %v1811 = vmul.f32 %v1808, %v1601
        %v1812 = vmul.f32 %v1808, %v1602
        %v1813 = vstv %s300
        %v1814 = vmul.f32 %v1813, %v1640
        %v1815 = vmul.f32 %v1813, %v1641
        %v1816 = vmul.f32 %v1813, %v1642
        %v1817 = vmul.f32 %v1813, %v1643
        %v1818 = vadd.f32 %v1809, %v1814
        %v1819 = vadd.f32 %v1810, %v1815
        %v1820 = vadd.f32 %v1811, %v1816
        %v1821 = vadd.f32 %v1812, %v1817
        %v1822 = vstv %s304
        %v1823 = vmul.f32 %v1822, %v1681
        %v1824 = vmul.f32 %v1822, %v1682
        %v1825 = vmul.f32 %v1822, %v1683
        %v1826 = vmul.f32 %v1822, %v1684
        %v1827 = vadd.f32 %v1818, %v1823
        %v1828 = vadd.f32 %v1819, %v1824
        %v1829 = vadd.f32 %v1820, %v1825
        %v1830 = vadd.f32 %v1821, %v1826
        %v1831 = vstv %s308
        %v1832 = vmul.f32 %v1831, %v1722
        %v1833 = vmul.f32 %v1831, %v1723
        %v1834 = vmul.f32 %v1831, %v1724
        %v1835 = vmul.f32 %v1831, %v1725
        %v1836 = vadd.f32 %v1827, %v1832
        %v1837 = vadd.f32 %v1828, %v1833
        %v1838 = vadd.f32 %v1829, %v1834
        %v1839 = vadd.f32 %v1830, %v1835
        %v1840 = vstv %s344
        %v1841 = vadd.f32 %v1836, %v1840
        %v1842 = vadd.f32 %v1837, %v1840
        %v1843 = vadd.f32 %v1838, %v1840
        %v1844 = vadd.f32 %v1839, %v1840
        %v1845 = vmax.f32 %v1841, 0.0
        %v1846 = vmax.f32 %v1842, 0.0
        %v1847 = vmax.f32 %v1843, 0.0
        %v1848 = vmax.f32 %v1844, 0.0
        %v1849 = vstv %s297
        %v1850 = vmul.f32 %v1849, %v1599
        %v1851 = vmul.f32 %v1849, %v1600
        %v1852 = vmul.f32 %v1849, %v1601
        %v1853 = vmul.f32 %v1849, %v1602
        %v1854 = vstv %s301
        %v1855 = vmul.f32 %v1854, %v1640
        %v1856 = vmul.f32 %v1854, %v1641
        %v1857 = vmul.f32 %v1854, %v1642
        %v1858 = vmul.f32 %v1854, %v1643
        %v1859 = vadd.f32 %v1850, %v1855
        %v1860 = vadd.f32 %v1851, %v1856
        %v1861 = vadd.f32 %v1852, %v1857
        %v1862 = vadd.f32 %v1853, %v1858
        %v1863 = vstv %s305
        %v1864 = vmul.f32 %v1863, %v1681
        %v1865 = vmul.f32 %v1863, %v1682
        %v1866 = vmul.f32 %v1863, %v1683
        %v1867 = vmul.f32 %v1863, %v1684
        %v1868 = vadd.f32 %v1859, %v1864
        %v1869 = vadd.f32 %v1860, %v1865
        %v1870 = vadd.f32 %v1861, %v1866
        %v1871 = vadd.f32 %v1862, %v1867
        %v1872 = vstv %s309
        %v1873 = vmul.f32 %v1872, %v1722
        %v1874 = vmul.f32 %v1872, %v1723
        %v1875 = vmul.f32 %v1872, %v1724
        %v1876 = vmul.f32 %v1872, %v1725
        %v1877 = vadd.f32 %v1868, %v1873
        %v1878 = vadd.f32 %v1869, %v1874
        %v1879 = vadd.f32 %v1870, %v1875
        %v1880 = vadd.f32 %v1871, %v1876
        %v1881 = vstv %s345
        %v1882 = vadd.f32 %v1877, %v1881
        %v1883 = vadd.f32 %v1878, %v1881
        %v1884 = vadd.f32 %v1879, %v1881
        %v1885 = vadd.f32 %v1880, %v1881
        %v1886 = vmax.f32 %v1882, 0.0
        %v1887 = vmax.f32 %v1883, 0.0
        %v1888 = vmax.f32 %v1884, 0.0
        %v1889 = vmax.f32 %v1885, 0.0
        %v1890 = vstv %s346
        %v1891 = vmul.f32 %v1890, %v1763
        %v1892 = vmul.f32 %v1890, %v1764
        %v1893 = vmul.f32 %v1890, %v1765
        %v1894 = vmul.f32 %v1890, %v1766
        %v1895 = vstv %s347
        %v1896 = vmul.f32 %v1895, %v1804
        %v1897 = vmul.f32 %v1895, %v1805
        %v1898 = vmul.f32 %v1895, %v1806
        %v1899 = vmul.f32 %v1895, %v1807
        %v1900 = vadd.f32 %v1891, %v1896
        %v1901 = vadd.f32 %v1892, %v1897
        %v1902 = vadd.f32 %v1893, %v1898
        %v1903 = vadd.f32 %v1894, %v1899
        %v1904 = vstv %s348
        %v1905 = vmul.f32 %v1904, %v1845
        %v1906 = vmul.f32 %v1904, %v1846
        %v1907 = vmul.f32 %v1904, %v1847
        %v1908 = vmul.f32 %v1904, %v1848
        %v1909 = vadd.f32 %v1900, %v1905
        %v1910 = vadd.f32 %v1901, %v1906
        %v1911 = vadd.f32 %v1902, %v1907
        %v1912 = vadd.f32 %v1903, %v1908
        %v1913 = vstv %s349
        %v1914 = vmul.f32 %v1913, %v1886
        %v1915 = vmul.f32 %v1913, %v1887
        %v1916 = vmul.f32 %v1913, %v1888
        %v1917 = vmul.f32 %v1913, %v1889
        %v1918 = vadd.f32 %v1909, %v1914
        %v1919 = vadd.f32 %v1910, %v1915
        %v1920 = vadd.f32 %v1911, %v1916
        %v1921 = vadd.f32 %v1912, %v1917
        %v1922 = vstv %s350
        %v1923 = vadd.f32 %v1918, %v1922
        %v1924 = vadd.f32 %v1919, %v1922
        %v1925 = vadd.f32 %v1920, %v1922
        %v1926 = vadd.f32 %v1921, %v1922
        %s1927 = smul.addr %s351, 8
        %s1928 = scalar_lea.vmem %s157, %s1927
        %1929 = vst [vmem:[%s1928] sm:$0xff] %v1923
        %1930 = vst [vmem:[%s1928 + $0x8] sm:$0xff] %v1924
        %1931 = vst [vmem:[%s1928 + $0x10] sm:$0xff] %v1925
        %1932 = vst [vmem:[%s1928 + $0x18] sm:$0xff] %v1926
        %p1933 = scmp.lt.s32.totalorder %s14, 1
        %s1934 = scalar_select %p1933, %s14, 1
        %s1935 = smul.addr %s1934, 4
        %s1936 = smul.addr %s1935, 8
        %s1937 = scalar_lea.vmem %s2, %s1936
        // Predicated region
        $region33: #{relu_fnn_forward.1} parent=27 // pred_check
          %p1938 = pneg %p79
        $region34: #{relu_fnn_forward.1} parent=27 // pred_check_branch
          %1940 = sbr.rel (%p1938) target = $region36
        $region35: #{relu_fnn_forward.1} parent=27 // pred_region
          _
        $region36: #{relu_fnn_forward.1} parent=27 // pred_fallthru
          _
      $region28: #{relu_fnn_forward.1} parent=5 // pred_fallthru
        _
      %p1941 = scmp.le.s32.totalorder 2, %s9
      // Predicated region
      $region37: #{relu_fnn_forward.1} parent=5 // pred_check
        %p1942 = pneg %p1941
      $region38: #{relu_fnn_forward.1} parent=5 // pred_check_branch
        %1944 = sbr.rel (%p1942) target = $region40
      $region39: #{relu_fnn_forward.1} parent=5 // pred_region
        %s1945 = ssub.s32 %s9, 2
        // Predicated region
        $region41: #{relu_fnn_forward.1} parent=39 // pred_check
          %p1946 = pneg %p85
        $region42: #{relu_fnn_forward.1} parent=39 // pred_check_branch
          %1948 = sbr.rel (%p1946) target = $region44
        $region43: #{relu_fnn_forward.1} parent=39 // pred_region
          %p1949 = scmp.lt.s32.totalorder %s15, 1
          %s1950 = scalar_select %p1949, %s15, 1
          %s1951 = smul.addr %s1950, 4
          %s1952 = smul.addr %s1951, 8
          %s1953 = scalar_lea.vmem %s2, %s1952
        $region44: #{relu_fnn_forward.1} parent=39 // pred_fallthru
          _
      $region40: #{relu_fnn_forward.1} parent=5 // pred_fallthru
        _
    $region6: #{relu_fnn_forward.1} parent=1 // loop_footer
      %s13 = sadd.s32 1, %s9
    $region7: #{relu_fnn_forward.1} parent=1 // loop_footer_branch
      %8 = sbr.rel target = $region3
    $region8: #{relu_fnn_forward.1} parent=1 // loop_exit
      _
    %1954 = vsyncpa [#allocation3], 1
    %s1955 = scalar_lea.sflag [#allocation3], 1
    %1956 = vsyncpa %s1955, 1

</llo_original>
